<compile_context>
chip_gen: v7x
topology: tpu7x:2x2x1
jax: 0.10.0
libtpu: 0.0.40
codegen_flags: <defaults>
</compile_context>

<pallas_src>
import functools
import math

import numpy as np

import jax
import jax.numpy as jnp
from jax import lax
from jax.experimental import pallas as pl
from jax.experimental.pallas import tpu as pltpu


def _bucket_from_d(d, num_buckets, max_distance):
  """T5 relative-position bucket for d = query_pos - key_pos (int32 array)."""
  half = num_buckets // 2
  max_exact = half // 2
  ret = jnp.where(d < 0, half, 0).astype(jnp.int32)
  a = jnp.abs(d)
  is_small = a < max_exact
  af = jnp.maximum(a, 1).astype(jnp.float32)        # guard log(0); masked below
  val_large = max_exact + (
      jnp.log(af / float(max_exact)) / math.log(max_distance / max_exact)
      * (half - max_exact)
  ).astype(jnp.int32)                               # trunc toward 0 == .long()
  val_large = jnp.minimum(val_large, half - 1)
  return ret + jnp.where(is_small, a, val_large)


def _rpb_tiled_kernel(tab_ref, o_ref, *, num_buckets, max_distance,
                      tile_i, tile_j):
  """Tiled Toeplitz path.  tab_ref: (heads, num_buckets) f32 in VMEM.
  o_ref: (heads, tile_i, tile_j) output block."""
  heads = o_ref.shape[0]
  half = num_buckets // 2
  i0 = pl.program_id(0) * tile_i
  j0 = pl.program_id(1) * tile_j
  d0 = i0 - j0                                      # traced int32 scalar

  def fill_const(bucket_id):
    # Whole tile is one bucket: pure broadcast + unmasked full-width stores.
    for h in range(heads):
      val = tab_ref[h:h + 1, bucket_id:bucket_id + 1]          # (1, 1) f32
      o_ref[h, :, :] = jnp.broadcast_to(
          val, (tile_i, tile_j)).astype(o_ref.dtype)

  # ---- constant-tile fast paths (scalar conditions, pl.when gated) ----------
  far_pos = d0 >= max_distance + tile_j - 1         # every d >=  max_distance
  far_neg = -d0 >= max_distance + tile_i - 1        # every d <= -max_distance

  @pl.when(far_pos)
  def _():
    fill_const(half - 1)

  @pl.when(far_neg)
  def _():
    fill_const(num_buckets - 1)

  # ---- general path: 1-D strip lookup + strided roll materialisation --------
  @pl.when(jnp.logical_not(jnp.logical_or(far_pos, far_neg)))
  def _():
    W = tile_i + tile_j
    # Strip layout chosen so that rolling the sublane-broadcast strip by
    # (1 + row) lanes (np.roll convention, stride 1 along sublanes) yields the
    # tile rows:  strip[t] = value(d0 + tile_i - 1 - ((t + tile_i) mod W)).
    t = lax.broadcasted_iota(jnp.int32, (heads, W), 1)
    mm = t + tile_i
    mm = jnp.where(mm >= W, mm - W, mm)             # (t + tile_i) mod W
    d = (d0 + tile_i - 1) - mm
    bucket = _bucket_from_d(d, num_buckets, max_distance)       # (heads, W)

    # 32-way table lookup on the strip only, all heads at once
    # (head h lives on sublane h, table columns broadcast along lanes).
    vals = jnp.broadcast_to(tab_ref[:, 0:1], (heads, W))
    for b in range(1, num_buckets):
      vals = jnp.where(bucket == b, tab_ref[:, b:b + 1], vals)

    # Materialise each head plane.  Row chunks of 64 keep live vregs bounded;
    # the roll runs on the XLU slot, stores are lane-dense full-width vst.
    chunk = min(tile_i, 64)
    for h in range(heads):
      strip_h = vals[h:h + 1, :]                                 # (1, W)
      for rr in range(0, tile_i, chunk):
        wide = jnp.broadcast_to(strip_h, (chunk, W))
        rolled = pltpu.roll(wide, 1 + rr, 1, stride=1, stride_axis=0)
        o_ref[h, rr:rr + chunk, :] = rolled[:, :tile_j].astype(o_ref.dtype)


def _rpb_small_kernel(tab_ref, o_ref, *, num_buckets, max_distance):
  """Full-extent-block path for small / non-128-aligned n.
  tab_ref: (h_blk, num_buckets) f32; o_ref: (h_blk, n, n)."""
  h_blk, n, _ = o_ref.shape
  ii = lax.broadcasted_iota(jnp.int32, (n, n), 0)
  jj = lax.broadcasted_iota(jnp.int32, (n, n), 1)
  bucket = _bucket_from_d(ii - jj, num_buckets, max_distance)
  # Bucket-major gather: mask computed once per bucket, shared across a small
  # group of heads (keeps accumulators within the vreg file).
  group = 2 if h_blk % 2 == 0 else 1
  for g0 in range(0, h_blk, group):
    hs = list(range(g0, min(g0 + group, h_blk)))
    acc = [jnp.broadcast_to(tab_ref[h:h + 1, 0:1], (n, n)) for h in hs]
    for b in range(1, num_buckets):
      m = bucket == b
      for k, h in enumerate(hs):
        acc[k] = jnp.where(m, tab_ref[h:h + 1, b:b + 1], acc[k])
    for k, h in enumerate(hs):
      o_ref[h, :, :] = acc[k].astype(o_ref.dtype)


def relative_position_bias(table, n, *, num_buckets=32, max_distance=128,
                           out_dtype=None):
  """table: (num_buckets, heads) embedding weight.  Returns (heads, n, n)."""
  nb, heads = table.shape
  assert nb == num_buckets
  assert max_distance > num_buckets // 4, "max_distance too small for buckets"
  out_dtype = table.dtype if out_dtype is None else out_dtype
  table_t = table.astype(jnp.float32).T              # (heads, num_buckets)
  out_bytes = heads * n * n * np.dtype(out_dtype).itemsize

  if n % 128 == 0 and n >= 256:
    # Tiled Toeplitz path: lane-dense (heads, 128, 256|128) blocks, 2-D grid.
    tile_i = 128
    tile_j = 256 if n % 256 == 0 else 128
    grid = (n // tile_i, n // tile_j)
    kernel = functools.partial(
        _rpb_tiled_kernel, num_buckets=num_buckets,
        max_distance=max_distance, tile_i=tile_i, tile_j=tile_j)
    return pl.pallas_call(
        kernel,
        out_shape=jax.ShapeDtypeStruct((heads, n, n), out_dtype),
        grid_spec=pltpu.PrefetchScalarGridSpec(
            num_scalar_prefetch=0,
            grid=grid,
            in_specs=[pl.BlockSpec((heads, num_buckets), lambda i, j: (0, 0))],
            out_specs=pl.BlockSpec((heads, tile_i, tile_j),
                                   lambda i, j: (0, i, j)),
        ),
        compiler_params=pltpu.CompilerParams(
            dimension_semantics=("parallel", "parallel")),
        cost_estimate=pl.CostEstimate(
            flops=4 * heads * n * n, transcendentals=2 * n,
            bytes_accessed=out_bytes),
    )(table_t)

  if n > 512:
    # TODO(synk): edge-tile path for large non-128-aligned n instead of the
    # pad+slice fallback (not hit by this module's typical sequence lengths).
    n_pad = ((n + 127) // 128) * 128
    return relative_position_bias(
        table, n_pad, num_buckets=num_buckets,
        max_distance=max_distance, out_dtype=out_dtype)[:, :n, :n]

  # Small / non-aligned n: full-extent blocks; grid splits heads so both
  # TensorCores of a v7x chip get work (1 TC chips just loop over 2 steps).
  hgroups = 2 if heads % 2 == 0 else 1
  h_blk = heads // hgroups
  table_g = table_t.reshape(hgroups, h_blk, num_buckets)
  kernel = functools.partial(_rpb_small_kernel, num_buckets=num_buckets,
                             max_distance=max_distance)
  return pl.pallas_call(
      kernel,
      out_shape=jax.ShapeDtypeStruct((heads, n, n), out_dtype),
      grid_spec=pltpu.PrefetchScalarGridSpec(
          num_scalar_prefetch=0,
          grid=(hgroups,),
          in_specs=[pl.BlockSpec((None, h_blk, num_buckets),
                                 lambda g: (g, 0, 0))],
          out_specs=pl.BlockSpec((h_blk, n, n), lambda g: (g, 0, 0)),
      ),
      compiler_params=pltpu.CompilerParams(dimension_semantics=("parallel",)),
      cost_estimate=pl.CostEstimate(
          flops=num_buckets * heads * n * n, transcendentals=n * n,
          bytes_accessed=out_bytes),
  )(table_g)


def _reference(table, n, *, num_buckets=32, max_distance=128):
  """Pure-JAX mirror of the PyTorch module's forward."""
  q = jnp.arange(n, dtype=jnp.int32)
  k = jnp.arange(n, dtype=jnp.int32)
  d = q[:, None] - k[None, :]                       # i - j  ( = -(rel_pos) )
  bucket = _bucket_from_d(d, num_buckets, max_distance)
  vals = table[bucket]                              # (n, n, heads)
  return jnp.transpose(vals, (2, 0, 1))             # (heads, n, n)


if __name__ == "__main__":
  key = jax.random.PRNGKey(0)
  heads, num_buckets = 8, 32
  # nn.Embedding default init ~ N(0, 1)
  table = jax.random.normal(key, (num_buckets, heads), dtype=jnp.float32)

  # Case 1: module defaults, small sequence -> full-extent-block kernel with
  # the head-split (2-block) grid.
  n1, md1 = 16, 128
  out1 = relative_position_bias(table, n1, num_buckets=num_buckets,
                                max_distance=md1)
  jax.block_until_ready(out1)
  ref1 = _reference(table, n1, num_buckets=num_buckets, max_distance=md1)
  assert out1.shape == (heads, n1, n1)
  assert jnp.allclose(out1, ref1, atol=1e-6, rtol=1e-6), "mismatch (n=16)"

  # Case 2: tiled Toeplitz path, (heads, 128, 256) blocks, grid (2, 1),
  # exercises the strip lookup + strided-roll materialisation and log branch.
  n2, md2 = 256, 100
  out2 = relative_position_bias(table, n2, num_buckets=num_buckets,
                                max_distance=md2)
  jax.block_until_ready(out2)
  ref2 = _reference(table, n2, num_buckets=num_buckets, max_distance=md2)
  assert out2.shape == (heads, n2, n2)
  assert jnp.allclose(out2, ref2, atol=1e-6, rtol=1e-6), "mismatch (n=256)"

  # Case 3: 3x3 grid with small max_distance so both constant-tile fast paths
  # (all bucket 15 / all bucket 31) and the general path are exercised.
  n3, md3 = 384, 36
  out3 = relative_position_bias(table, n3, num_buckets=num_buckets,
                                max_distance=md3)
  jax.block_until_ready(out3)
  ref3 = _reference(table, n3, num_buckets=num_buckets, max_distance=md3)
  assert out3.shape == (heads, n3, n3)
  assert jnp.allclose(out3, ref3, atol=1e-6, rtol=1e-6), "mismatch (n=384)"

  # Case 4: low-precision output, cast only at the final store.
  out4 = relative_position_bias(table, n2, num_buckets=num_buckets,
                                max_distance=md2, out_dtype=jnp.bfloat16)
  jax.block_until_ready(out4)
  assert out4.dtype == jnp.bfloat16
  assert jnp.allclose(out4.astype(jnp.float32),
                      ref2.astype(jnp.bfloat16).astype(jnp.float32),
                      atol=1e-2, rtol=1e-2), "mismatch (bf16 output)"

  print("KERNEL_OK")
</pallas_src>

<mosaic_0001>
module attributes {stable_mosaic.version = 11 : i64} {
  func.func @_rpb_small_kernel(%arg0: i32, %arg1: memref<1x4x32xf32, #tpu.memory_space<vmem>>, %arg2: memref<4x16x16xf32, #tpu.memory_space<vmem>>) attributes {dimension_semantics = [#tpu.dimension_semantics<parallel>], iteration_bounds = array<i64: 2>, scalar_prefetch = 0 : i64, scratch_operands = 0 : i64, tpu.core_type = #tpu.core_type<tc>, window_params = [{transform_indices = @transform_0, window_bounds = array<i64: 1, 4, 32>}, {transform_indices = @transform_1, window_bounds = array<i64: 4, 16, 16>}]} {
    %0 = tpu.iota {dimensions = array<i32: 0>} : vector<16x16xi32>
    %1 = tpu.iota {dimensions = array<i32: 1>} : vector<16x16xi32>
    %2 = arith.subi %0, %1 : vector<16x16xi32>
    %c0_i32 = arith.constant 0 : i32
    %3 = vector.broadcast %c0_i32 : i32 to vector<16x16xi32>
    %4 = arith.cmpi slt, %2, %3 : vector<16x16xi32>
    %c16_i32 = arith.constant 16 : i32
    %c0_i32_0 = arith.constant 0 : i32
    %5 = vector.broadcast %c16_i32 : i32 to vector<16x16xi32>
    %6 = vector.broadcast %c0_i32_0 : i32 to vector<16x16xi32>
    %7 = arith.select %4, %5, %6 : vector<16x16xi1>, vector<16x16xi32>
    %8 = math.absi %2 : vector<16x16xi32>
    %c8_i32 = arith.constant 8 : i32
    %9 = vector.broadcast %c8_i32 : i32 to vector<16x16xi32>
    %10 = arith.cmpi slt, %8, %9 : vector<16x16xi32>
    %c1_i32 = arith.constant 1 : i32
    %11 = vector.broadcast %c1_i32 : i32 to vector<16x16xi32>
    %12 = arith.maxsi %8, %11 : vector<16x16xi32>
    %13 = arith.sitofp %12 : vector<16x16xi32> to vector<16x16xf32>
    %cst = arith.constant 8.000000e+00 : f32
    %14 = vector.broadcast %cst : f32 to vector<16x16xf32>
    %15 = arith.divf %13, %14 : vector<16x16xf32>
    %16 = math.log %15 : vector<16x16xf32>
    %cst_1 = arith.constant 2.77258873 : f32
    %17 = vector.broadcast %cst_1 : f32 to vector<16x16xf32>
    %18 = arith.divf %16, %17 : vector<16x16xf32>
    %cst_2 = arith.constant 8.000000e+00 : f32
    %19 = vector.broadcast %cst_2 : f32 to vector<16x16xf32>
    %20 = arith.mulf %18, %19 : vector<16x16xf32>
    %21 = arith.fptosi %20 : vector<16x16xf32> to vector<16x16xi32>
    %c8_i32_3 = arith.constant 8 : i32
    %22 = vector.broadcast %c8_i32_3 : i32 to vector<16x16xi32>
    %23 = arith.addi %22, %21 : vector<16x16xi32>
    %c15_i32 = arith.constant 15 : i32
    %24 = vector.broadcast %c15_i32 : i32 to vector<16x16xi32>
    %25 = arith.minsi %23, %24 : vector<16x16xi32>
    %26 = arith.select %10, %8, %25 : vector<16x16xi1>, vector<16x16xi32>
    %27 = arith.addi %7, %26 : vector<16x16xi32>
    %c0 = arith.constant 0 : index
    %c0_4 = arith.constant 0 : index
    %c0_5 = arith.constant 0 : index
    %28 = vector.load %arg1[%c0, %c0_4, %c0_5] : memref<1x4x32xf32, #tpu.memory_space<vmem>>, vector<1x1x1xf32>
    %29 = vector.shape_cast %28 : vector<1x1x1xf32> to vector<1x1xf32>
    %30 = vector.shape_cast %29 : vector<1x1xf32> to vector<1x1xf32>
    %31 = vector.broadcast %30 : vector<1x1xf32> to vector<16x16xf32>
    %c0_6 = arith.constant 0 : index
    %c1 = arith.constant 1 : index
    %c0_7 = arith.constant 0 : index
    %32 = vector.load %arg1[%c0_6, %c1, %c0_7] : memref<1x4x32xf32, #tpu.memory_space<vmem>>, vector<1x1x1xf32>
    %33 = vector.shape_cast %32 : vector<1x1x1xf32> to vector<1x1xf32>
    %34 = vector.shape_cast %33 : vector<1x1xf32> to vector<1x1xf32>
    %35 = vector.broadcast %34 : vector<1x1xf32> to vector<16x16xf32>
    %c1_i32_8 = arith.constant 1 : i32
    %36 = vector.broadcast %c1_i32_8 : i32 to vector<16x16xi32>
    %37 = arith.cmpi eq, %27, %36 : vector<16x16xi32>
    %c0_9 = arith.constant 0 : index
    %c0_10 = arith.constant 0 : index
    %c1_11 = arith.constant 1 : index
    %38 = vector.load %arg1[%c0_9, %c0_10, %c1_11] : memref<1x4x32xf32, #tpu.memory_space<vmem>>, vector<1x1x1xf32>
    %39 = vector.shape_cast %38 : vector<1x1x1xf32> to vector<1x1xf32>
    %40 = vector.shape_cast %39 : vector<1x1xf32> to vector<1x1xf32>
    %41 = vector.broadcast %40 : vector<1x1xf32> to vector<16x16xf32>
    %42 = arith.select %37, %41, %31 : vector<16x16xi1>, vector<16x16xf32>
    %c0_12 = arith.constant 0 : index
    %c1_13 = arith.constant 1 : index
    %c1_14 = arith.constant 1 : index
    %43 = vector.load %arg1[%c0_12, %c1_13, %c1_14] : memref<1x4x32xf32, #tpu.memory_space<vmem>>, vector<1x1x1xf32>
    %44 = vector.shape_cast %43 : vector<1x1x1xf32> to vector<1x1xf32>
    %45 = vector.shape_cast %44 : vector<1x1xf32> to vector<1x1xf32>
    %46 = vector.broadcast %45 : vector<1x1xf32> to vector<16x16xf32>
    %47 = arith.select %37, %46, %35 : vector<16x16xi1>, vector<16x16xf32>
    %c2_i32 = arith.constant 2 : i32
    %48 = vector.broadcast %c2_i32 : i32 to vector<16x16xi32>
    %49 = arith.cmpi eq, %27, %48 : vector<16x16xi32>
    %c0_15 = arith.constant 0 : index
    %c0_16 = arith.constant 0 : index
    %c2 = arith.constant 2 : index
    %50 = vector.load %arg1[%c0_15, %c0_16, %c2] : memref<1x4x32xf32, #tpu.memory_space<vmem>>, vector<1x1x1xf32>
    %51 = vector.shape_cast %50 : vector<1x1x1xf32> to vector<1x1xf32>
    %52 = vector.shape_cast %51 : vector<1x1xf32> to vector<1x1xf32>
    %53 = vector.broadcast %52 : vector<1x1xf32> to vector<16x16xf32>
    %54 = arith.select %49, %53, %42 : vector<16x16xi1>, vector<16x16xf32>
    %c0_17 = arith.constant 0 : index
    %c1_18 = arith.constant 1 : index
    %c2_19 = arith.constant 2 : index
    %55 = vector.load %arg1[%c0_17, %c1_18, %c2_19] : memref<1x4x32xf32, #tpu.memory_space<vmem>>, vector<1x1x1xf32>
    %56 = vector.shape_cast %55 : vector<1x1x1xf32> to vector<1x1xf32>
    %57 = vector.shape_cast %56 : vector<1x1xf32> to vector<1x1xf32>
    %58 = vector.broadcast %57 : vector<1x1xf32> to vector<16x16xf32>
    %59 = arith.select %49, %58, %47 : vector<16x16xi1>, vector<16x16xf32>
    %c3_i32 = arith.constant 3 : i32
    %60 = vector.broadcast %c3_i32 : i32 to vector<16x16xi32>
    %61 = arith.cmpi eq, %27, %60 : vector<16x16xi32>
    %c0_20 = arith.constant 0 : index
    %c0_21 = arith.constant 0 : index
    %c3 = arith.constant 3 : index
    %62 = vector.load %arg1[%c0_20, %c0_21, %c3] : memref<1x4x32xf32, #tpu.memory_space<vmem>>, vector<1x1x1xf32>
    %63 = vector.shape_cast %62 : vector<1x1x1xf32> to vector<1x1xf32>
    %64 = vector.shape_cast %63 : vector<1x1xf32> to vector<1x1xf32>
    %65 = vector.broadcast %64 : vector<1x1xf32> to vector<16x16xf32>
    %66 = arith.select %61, %65, %54 : vector<16x16xi1>, vector<16x16xf32>
    %c0_22 = arith.constant 0 : index
    %c1_23 = arith.constant 1 : index
    %c3_24 = arith.constant 3 : index
    %67 = vector.load %arg1[%c0_22, %c1_23, %c3_24] : memref<1x4x32xf32, #tpu.memory_space<vmem>>, vector<1x1x1xf32>
    %68 = vector.shape_cast %67 : vector<1x1x1xf32> to vector<1x1xf32>
    %69 = vector.shape_cast %68 : vector<1x1xf32> to vector<1x1xf32>
    %70 = vector.broadcast %69 : vector<1x1xf32> to vector<16x16xf32>
    %71 = arith.select %61, %70, %59 : vector<16x16xi1>, vector<16x16xf32>
    %c4_i32 = arith.constant 4 : i32
    %72 = vector.broadcast %c4_i32 : i32 to vector<16x16xi32>
    %73 = arith.cmpi eq, %27, %72 : vector<16x16xi32>
    %c0_25 = arith.constant 0 : index
    %c0_26 = arith.constant 0 : index
    %c4 = arith.constant 4 : index
    %74 = vector.load %arg1[%c0_25, %c0_26, %c4] : memref<1x4x32xf32, #tpu.memory_space<vmem>>, vector<1x1x1xf32>
    %75 = vector.shape_cast %74 : vector<1x1x1xf32> to vector<1x1xf32>
    %76 = vector.shape_cast %75 : vector<1x1xf32> to vector<1x1xf32>
    %77 = vector.broadcast %76 : vector<1x1xf32> to vector<16x16xf32>
    %78 = arith.select %73, %77, %66 : vector<16x16xi1>, vector<16x16xf32>
    %c0_27 = arith.constant 0 : index
    %c1_28 = arith.constant 1 : index
    %c4_29 = arith.constant 4 : index
    %79 = vector.load %arg1[%c0_27, %c1_28, %c4_29] : memref<1x4x32xf32, #tpu.memory_space<vmem>>, vector<1x1x1xf32>
    %80 = vector.shape_cast %79 : vector<1x1x1xf32> to vector<1x1xf32>
    %81 = vector.shape_cast %80 : vector<1x1xf32> to vector<1x1xf32>
    %82 = vector.broadcast %81 : vector<1x1xf32> to vector<16x16xf32>
    %83 = arith.select %73, %82, %71 : vector<16x16xi1>, vector<16x16xf32>
    %c5_i32 = arith.constant 5 : i32
    %84 = vector.broadcast %c5_i32 : i32 to vector<16x16xi32>
    %85 = arith.cmpi eq, %27, %84 : vector<16x16xi32>
    %c0_30 = arith.constant 0 : index
    %c0_31 = arith.constant 0 : index
    %c5 = arith.constant 5 : index
    %86 = vector.load %arg1[%c0_30, %c0_31, %c5] : memref<1x4x32xf32, #tpu.memory_space<vmem>>, vector<1x1x1xf32>
    %87 = vector.shape_cast %86 : vector<1x1x1xf32> to vector<1x1xf32>
    %88 = vector.shape_cast %87 : vector<1x1xf32> to vector<1x1xf32>
    %89 = vector.broadcast %88 : vector<1x1xf32> to vector<16x16xf32>
    %90 = arith.select %85, %89, %78 : vector<16x16xi1>, vector<16x16xf32>
    %c0_32 = arith.constant 0 : index
    %c1_33 = arith.constant 1 : index
    %c5_34 = arith.constant 5 : index
    %91 = vector.load %arg1[%c0_32, %c1_33, %c5_34] : memref<1x4x32xf32, #tpu.memory_space<vmem>>, vector<1x1x1xf32>
    %92 = vector.shape_cast %91 : vector<1x1x1xf32> to vector<1x1xf32>
    %93 = vector.shape_cast %92 : vector<1x1xf32> to vector<1x1xf32>
    %94 = vector.broadcast %93 : vector<1x1xf32> to vector<16x16xf32>
    %95 = arith.select %85, %94, %83 : vector<16x16xi1>, vector<16x16xf32>
    %c6_i32 = arith.constant 6 : i32
    %96 = vector.broadcast %c6_i32 : i32 to vector<16x16xi32>
    %97 = arith.cmpi eq, %27, %96 : vector<16x16xi32>
    %c0_35 = arith.constant 0 : index
    %c0_36 = arith.constant 0 : index
    %c6 = arith.constant 6 : index
    %98 = vector.load %arg1[%c0_35, %c0_36, %c6] : memref<1x4x32xf32, #tpu.memory_space<vmem>>, vector<1x1x1xf32>
    %99 = vector.shape_cast %98 : vector<1x1x1xf32> to vector<1x1xf32>
    %100 = vector.shape_cast %99 : vector<1x1xf32> to vector<1x1xf32>
    %101 = vector.broadcast %100 : vector<1x1xf32> to vector<16x16xf32>
    %102 = arith.select %97, %101, %90 : vector<16x16xi1>, vector<16x16xf32>
    %c0_37 = arith.constant 0 : index
    %c1_38 = arith.constant 1 : index
    %c6_39 = arith.constant 6 : index
    %103 = vector.load %arg1[%c0_37, %c1_38, %c6_39] : memref<1x4x32xf32, #tpu.memory_space<vmem>>, vector<1x1x1xf32>
    %104 = vector.shape_cast %103 : vector<1x1x1xf32> to vector<1x1xf32>
    %105 = vector.shape_cast %104 : vector<1x1xf32> to vector<1x1xf32>
    %106 = vector.broadcast %105 : vector<1x1xf32> to vector<16x16xf32>
    %107 = arith.select %97, %106, %95 : vector<16x16xi1>, vector<16x16xf32>
    %c7_i32 = arith.constant 7 : i32
    %108 = vector.broadcast %c7_i32 : i32 to vector<16x16xi32>
    %109 = arith.cmpi eq, %27, %108 : vector<16x16xi32>
    %c0_40 = arith.constant 0 : index
    %c0_41 = arith.constant 0 : index
    %c7 = arith.constant 7 : index
    %110 = vector.load %arg1[%c0_40, %c0_41, %c7] : memref<1x4x32xf32, #tpu.memory_space<vmem>>, vector<1x1x1xf32>
    %111 = vector.shape_cast %110 : vector<1x1x1xf32> to vector<1x1xf32>
    %112 = vector.shape_cast %111 : vector<1x1xf32> to vector<1x1xf32>
    %113 = vector.broadcast %112 : vector<1x1xf32> to vector<16x16xf32>
    %114 = arith.select %109, %113, %102 : vector<16x16xi1>, vector<16x16xf32>
    %c0_42 = arith.constant 0 : index
    %c1_43 = arith.constant 1 : index
    %c7_44 = arith.constant 7 : index
    %115 = vector.load %arg1[%c0_42, %c1_43, %c7_44] : memref<1x4x32xf32, #tpu.memory_space<vmem>>, vector<1x1x1xf32>
    %116 = vector.shape_cast %115 : vector<1x1x1xf32> to vector<1x1xf32>
    %117 = vector.shape_cast %116 : vector<1x1xf32> to vector<1x1xf32>
    %118 = vector.broadcast %117 : vector<1x1xf32> to vector<16x16xf32>
    %119 = arith.select %109, %118, %107 : vector<16x16xi1>, vector<16x16xf32>
    %c8_i32_45 = arith.constant 8 : i32
    %120 = vector.broadcast %c8_i32_45 : i32 to vector<16x16xi32>
    %121 = arith.cmpi eq, %27, %120 : vector<16x16xi32>
    %c0_46 = arith.constant 0 : index
    %c0_47 = arith.constant 0 : index
    %c8 = arith.constant 8 : index
    %122 = vector.load %arg1[%c0_46, %c0_47, %c8] : memref<1x4x32xf32, #tpu.memory_space<vmem>>, vector<1x1x1xf32>
    %123 = vector.shape_cast %122 : vector<1x1x1xf32> to vector<1x1xf32>
    %124 = vector.shape_cast %123 : vector<1x1xf32> to vector<1x1xf32>
    %125 = vector.broadcast %124 : vector<1x1xf32> to vector<16x16xf32>
    %126 = arith.select %121, %125, %114 : vector<16x16xi1>, vector<16x16xf32>
    %c0_48 = arith.constant 0 : index
    %c1_49 = arith.constant 1 : index
    %c8_50 = arith.constant 8 : index
    %127 = vector.load %arg1[%c0_48, %c1_49, %c8_50] : memref<1x4x32xf32, #tpu.memory_space<vmem>>, vector<1x1x1xf32>
    %128 = vector.shape_cast %127 : vector<1x1x1xf32> to vector<1x1xf32>
    %129 = vector.shape_cast %128 : vector<1x1xf32> to vector<1x1xf32>
    %130 = vector.broadcast %129 : vector<1x1xf32> to vector<16x16xf32>
    %131 = arith.select %121, %130, %119 : vector<16x16xi1>, vector<16x16xf32>
    %c9_i32 = arith.constant 9 : i32
    %132 = vector.broadcast %c9_i32 : i32 to vector<16x16xi32>
    %133 = arith.cmpi eq, %27, %132 : vector<16x16xi32>
    %c0_51 = arith.constant 0 : index
    %c0_52 = arith.constant 0 : index
    %c9 = arith.constant 9 : index
    %134 = vector.load %arg1[%c0_51, %c0_52, %c9] : memref<1x4x32xf32, #tpu.memory_space<vmem>>, vector<1x1x1xf32>
    %135 = vector.shape_cast %134 : vector<1x1x1xf32> to vector<1x1xf32>
    %136 = vector.shape_cast %135 : vector<1x1xf32> to vector<1x1xf32>
    %137 = vector.broadcast %136 : vector<1x1xf32> to vector<16x16xf32>
    %138 = arith.select %133, %137, %126 : vector<16x16xi1>, vector<16x16xf32>
    %c0_53 = arith.constant 0 : index
    %c1_54 = arith.constant 1 : index
    %c9_55 = arith.constant 9 : index
    %139 = vector.load %arg1[%c0_53, %c1_54, %c9_55] : memref<1x4x32xf32, #tpu.memory_space<vmem>>, vector<1x1x1xf32>
    %140 = vector.shape_cast %139 : vector<1x1x1xf32> to vector<1x1xf32>
    %141 = vector.shape_cast %140 : vector<1x1xf32> to vector<1x1xf32>
    %142 = vector.broadcast %141 : vector<1x1xf32> to vector<16x16xf32>
    %143 = arith.select %133, %142, %131 : vector<16x16xi1>, vector<16x16xf32>
    %c10_i32 = arith.constant 10 : i32
    %144 = vector.broadcast %c10_i32 : i32 to vector<16x16xi32>
    %145 = arith.cmpi eq, %27, %144 : vector<16x16xi32>
    %c0_56 = arith.constant 0 : index
    %c0_57 = arith.constant 0 : index
    %c10 = arith.constant 10 : index
    %146 = vector.load %arg1[%c0_56, %c0_57, %c10] : memref<1x4x32xf32, #tpu.memory_space<vmem>>, vector<1x1x1xf32>
    %147 = vector.shape_cast %146 : vector<1x1x1xf32> to vector<1x1xf32>
    %148 = vector.shape_cast %147 : vector<1x1xf32> to vector<1x1xf32>
    %149 = vector.broadcast %148 : vector<1x1xf32> to vector<16x16xf32>
    %150 = arith.select %145, %149, %138 : vector<16x16xi1>, vector<16x16xf32>
    %c0_58 = arith.constant 0 : index
    %c1_59 = arith.constant 1 : index
    %c10_60 = arith.constant 10 : index
    %151 = vector.load %arg1[%c0_58, %c1_59, %c10_60] : memref<1x4x32xf32, #tpu.memory_space<vmem>>, vector<1x1x1xf32>
    %152 = vector.shape_cast %151 : vector<1x1x1xf32> to vector<1x1xf32>
    %153 = vector.shape_cast %152 : vector<1x1xf32> to vector<1x1xf32>
    %154 = vector.broadcast %153 : vector<1x1xf32> to vector<16x16xf32>
    %155 = arith.select %145, %154, %143 : vector<16x16xi1>, vector<16x16xf32>
    %c11_i32 = arith.constant 11 : i32
    %156 = vector.broadcast %c11_i32 : i32 to vector<16x16xi32>
    %157 = arith.cmpi eq, %27, %156 : vector<16x16xi32>
    %c0_61 = arith.constant 0 : index
    %c0_62 = arith.constant 0 : index
    %c11 = arith.constant 11 : index
    %158 = vector.load %arg1[%c0_61, %c0_62, %c11] : memref<1x4x32xf32, #tpu.memory_space<vmem>>, vector<1x1x1xf32>
    %159 = vector.shape_cast %158 : vector<1x1x1xf32> to vector<1x1xf32>
    %160 = vector.shape_cast %159 : vector<1x1xf32> to vector<1x1xf32>
    %161 = vector.broadcast %160 : vector<1x1xf32> to vector<16x16xf32>
    %162 = arith.select %157, %161, %150 : vector<16x16xi1>, vector<16x16xf32>
    %c0_63 = arith.constant 0 : index
    %c1_64 = arith.constant 1 : index
    %c11_65 = arith.constant 11 : index
    %163 = vector.load %arg1[%c0_63, %c1_64, %c11_65] : memref<1x4x32xf32, #tpu.memory_space<vmem>>, vector<1x1x1xf32>
    %164 = vector.shape_cast %163 : vector<1x1x1xf32> to vector<1x1xf32>
    %165 = vector.shape_cast %164 : vector<1x1xf32> to vector<1x1xf32>
    %166 = vector.broadcast %165 : vector<1x1xf32> to vector<16x16xf32>
    %167 = arith.select %157, %166, %155 : vector<16x16xi1>, vector<16x16xf32>
    %c12_i32 = arith.constant 12 : i32
    %168 = vector.broadcast %c12_i32 : i32 to vector<16x16xi32>
    %169 = arith.cmpi eq, %27, %168 : vector<16x16xi32>
    %c0_66 = arith.constant 0 : index
    %c0_67 = arith.constant 0 : index
    %c12 = arith.constant 12 : index
    %170 = vector.load %arg1[%c0_66, %c0_67, %c12] : memref<1x4x32xf32, #tpu.memory_space<vmem>>, vector<1x1x1xf32>
    %171 = vector.shape_cast %170 : vector<1x1x1xf32> to vector<1x1xf32>
    %172 = vector.shape_cast %171 : vector<1x1xf32> to vector<1x1xf32>
    %173 = vector.broadcast %172 : vector<1x1xf32> to vector<16x16xf32>
    %174 = arith.select %169, %173, %162 : vector<16x16xi1>, vector<16x16xf32>
    %c0_68 = arith.constant 0 : index
    %c1_69 = arith.constant 1 : index
    %c12_70 = arith.constant 12 : index
    %175 = vector.load %arg1[%c0_68, %c1_69, %c12_70] : memref<1x4x32xf32, #tpu.memory_space<vmem>>, vector<1x1x1xf32>
    %176 = vector.shape_cast %175 : vector<1x1x1xf32> to vector<1x1xf32>
    %177 = vector.shape_cast %176 : vector<1x1xf32> to vector<1x1xf32>
    %178 = vector.broadcast %177 : vector<1x1xf32> to vector<16x16xf32>
    %179 = arith.select %169, %178, %167 : vector<16x16xi1>, vector<16x16xf32>
    %c13_i32 = arith.constant 13 : i32
    %180 = vector.broadcast %c13_i32 : i32 to vector<16x16xi32>
    %181 = arith.cmpi eq, %27, %180 : vector<16x16xi32>
    %c0_71 = arith.constant 0 : index
    %c0_72 = arith.constant 0 : index
    %c13 = arith.constant 13 : index
    %182 = vector.load %arg1[%c0_71, %c0_72, %c13] : memref<1x4x32xf32, #tpu.memory_space<vmem>>, vector<1x1x1xf32>
    %183 = vector.shape_cast %182 : vector<1x1x1xf32> to vector<1x1xf32>
    %184 = vector.shape_cast %183 : vector<1x1xf32> to vector<1x1xf32>
    %185 = vector.broadcast %184 : vector<1x1xf32> to vector<16x16xf32>
    %186 = arith.select %181, %185, %174 : vector<16x16xi1>, vector<16x16xf32>
    %c0_73 = arith.constant 0 : index
    %c1_74 = arith.constant 1 : index
    %c13_75 = arith.constant 13 : index
    %187 = vector.load %arg1[%c0_73, %c1_74, %c13_75] : memref<1x4x32xf32, #tpu.memory_space<vmem>>, vector<1x1x1xf32>
    %188 = vector.shape_cast %187 : vector<1x1x1xf32> to vector<1x1xf32>
    %189 = vector.shape_cast %188 : vector<1x1xf32> to vector<1x1xf32>
    %190 = vector.broadcast %189 : vector<1x1xf32> to vector<16x16xf32>
    %191 = arith.select %181, %190, %179 : vector<16x16xi1>, vector<16x16xf32>
    %c14_i32 = arith.constant 14 : i32
    %192 = vector.broadcast %c14_i32 : i32 to vector<16x16xi32>
    %193 = arith.cmpi eq, %27, %192 : vector<16x16xi32>
    %c0_76 = arith.constant 0 : index
    %c0_77 = arith.constant 0 : index
    %c14 = arith.constant 14 : index
    %194 = vector.load %arg1[%c0_76, %c0_77, %c14] : memref<1x4x32xf32, #tpu.memory_space<vmem>>, vector<1x1x1xf32>
    %195 = vector.shape_cast %194 : vector<1x1x1xf32> to vector<1x1xf32>
    %196 = vector.shape_cast %195 : vector<1x1xf32> to vector<1x1xf32>
    %197 = vector.broadcast %196 : vector<1x1xf32> to vector<16x16xf32>
    %198 = arith.select %193, %197, %186 : vector<16x16xi1>, vector<16x16xf32>
    %c0_78 = arith.constant 0 : index
    %c1_79 = arith.constant 1 : index
    %c14_80 = arith.constant 14 : index
    %199 = vector.load %arg1[%c0_78, %c1_79, %c14_80] : memref<1x4x32xf32, #tpu.memory_space<vmem>>, vector<1x1x1xf32>
    %200 = vector.shape_cast %199 : vector<1x1x1xf32> to vector<1x1xf32>
    %201 = vector.shape_cast %200 : vector<1x1xf32> to vector<1x1xf32>
    %202 = vector.broadcast %201 : vector<1x1xf32> to vector<16x16xf32>
    %203 = arith.select %193, %202, %191 : vector<16x16xi1>, vector<16x16xf32>
    %c15_i32_81 = arith.constant 15 : i32
    %204 = vector.broadcast %c15_i32_81 : i32 to vector<16x16xi32>
    %205 = arith.cmpi eq, %27, %204 : vector<16x16xi32>
    %c0_82 = arith.constant 0 : index
    %c0_83 = arith.constant 0 : index
    %c15 = arith.constant 15 : index
    %206 = vector.load %arg1[%c0_82, %c0_83, %c15] : memref<1x4x32xf32, #tpu.memory_space<vmem>>, vector<1x1x1xf32>
    %207 = vector.shape_cast %206 : vector<1x1x1xf32> to vector<1x1xf32>
    %208 = vector.shape_cast %207 : vector<1x1xf32> to vector<1x1xf32>
    %209 = vector.broadcast %208 : vector<1x1xf32> to vector<16x16xf32>
    %210 = arith.select %205, %209, %198 : vector<16x16xi1>, vector<16x16xf32>
    %c0_84 = arith.constant 0 : index
    %c1_85 = arith.constant 1 : index
    %c15_86 = arith.constant 15 : index
    %211 = vector.load %arg1[%c0_84, %c1_85, %c15_86] : memref<1x4x32xf32, #tpu.memory_space<vmem>>, vector<1x1x1xf32>
    %212 = vector.shape_cast %211 : vector<1x1x1xf32> to vector<1x1xf32>
    %213 = vector.shape_cast %212 : vector<1x1xf32> to vector<1x1xf32>
    %214 = vector.broadcast %213 : vector<1x1xf32> to vector<16x16xf32>
    %215 = arith.select %205, %214, %203 : vector<16x16xi1>, vector<16x16xf32>
    %c16_i32_87 = arith.constant 16 : i32
    %216 = vector.broadcast %c16_i32_87 : i32 to vector<16x16xi32>
    %217 = arith.cmpi eq, %27, %216 : vector<16x16xi32>
    %c0_88 = arith.constant 0 : index
    %c0_89 = arith.constant 0 : index
    %c16 = arith.constant 16 : index
    %218 = vector.load %arg1[%c0_88, %c0_89, %c16] : memref<1x4x32xf32, #tpu.memory_space<vmem>>, vector<1x1x1xf32>
    %219 = vector.shape_cast %218 : vector<1x1x1xf32> to vector<1x1xf32>
    %220 = vector.shape_cast %219 : vector<1x1xf32> to vector<1x1xf32>
    %221 = vector.broadcast %220 : vector<1x1xf32> to vector<16x16xf32>
    %222 = arith.select %217, %221, %210 : vector<16x16xi1>, vector<16x16xf32>
    %c0_90 = arith.constant 0 : index
    %c1_91 = arith.constant 1 : index
    %c16_92 = arith.constant 16 : index
    %223 = vector.load %arg1[%c0_90, %c1_91, %c16_92] : memref<1x4x32xf32, #tpu.memory_space<vmem>>, vector<1x1x1xf32>
    %224 = vector.shape_cast %223 : vector<1x1x1xf32> to vector<1x1xf32>
    %225 = vector.shape_cast %224 : vector<1x1xf32> to vector<1x1xf32>
    %226 = vector.broadcast %225 : vector<1x1xf32> to vector<16x16xf32>
    %227 = arith.select %217, %226, %215 : vector<16x16xi1>, vector<16x16xf32>
    %c17_i32 = arith.constant 17 : i32
    %228 = vector.broadcast %c17_i32 : i32 to vector<16x16xi32>
    %229 = arith.cmpi eq, %27, %228 : vector<16x16xi32>
    %c0_93 = arith.constant 0 : index
    %c0_94 = arith.constant 0 : index
    %c17 = arith.constant 17 : index
    %230 = vector.load %arg1[%c0_93, %c0_94, %c17] : memref<1x4x32xf32, #tpu.memory_space<vmem>>, vector<1x1x1xf32>
    %231 = vector.shape_cast %230 : vector<1x1x1xf32> to vector<1x1xf32>
    %232 = vector.shape_cast %231 : vector<1x1xf32> to vector<1x1xf32>
    %233 = vector.broadcast %232 : vector<1x1xf32> to vector<16x16xf32>
    %234 = arith.select %229, %233, %222 : vector<16x16xi1>, vector<16x16xf32>
    %c0_95 = arith.constant 0 : index
    %c1_96 = arith.constant 1 : index
    %c17_97 = arith.constant 17 : index
    %235 = vector.load %arg1[%c0_95, %c1_96, %c17_97] : memref<1x4x32xf32, #tpu.memory_space<vmem>>, vector<1x1x1xf32>
    %236 = vector.shape_cast %235 : vector<1x1x1xf32> to vector<1x1xf32>
    %237 = vector.shape_cast %236 : vector<1x1xf32> to vector<1x1xf32>
    %238 = vector.broadcast %237 : vector<1x1xf32> to vector<16x16xf32>
    %239 = arith.select %229, %238, %227 : vector<16x16xi1>, vector<16x16xf32>
    %c18_i32 = arith.constant 18 : i32
    %240 = vector.broadcast %c18_i32 : i32 to vector<16x16xi32>
    %241 = arith.cmpi eq, %27, %240 : vector<16x16xi32>
    %c0_98 = arith.constant 0 : index
    %c0_99 = arith.constant 0 : index
    %c18 = arith.constant 18 : index
    %242 = vector.load %arg1[%c0_98, %c0_99, %c18] : memref<1x4x32xf32, #tpu.memory_space<vmem>>, vector<1x1x1xf32>
    %243 = vector.shape_cast %242 : vector<1x1x1xf32> to vector<1x1xf32>
    %244 = vector.shape_cast %243 : vector<1x1xf32> to vector<1x1xf32>
    %245 = vector.broadcast %244 : vector<1x1xf32> to vector<16x16xf32>
    %246 = arith.select %241, %245, %234 : vector<16x16xi1>, vector<16x16xf32>
    %c0_100 = arith.constant 0 : index
    %c1_101 = arith.constant 1 : index
    %c18_102 = arith.constant 18 : index
    %247 = vector.load %arg1[%c0_100, %c1_101, %c18_102] : memref<1x4x32xf32, #tpu.memory_space<vmem>>, vector<1x1x1xf32>
    %248 = vector.shape_cast %247 : vector<1x1x1xf32> to vector<1x1xf32>
    %249 = vector.shape_cast %248 : vector<1x1xf32> to vector<1x1xf32>
    %250 = vector.broadcast %249 : vector<1x1xf32> to vector<16x16xf32>
    %251 = arith.select %241, %250, %239 : vector<16x16xi1>, vector<16x16xf32>
    %c19_i32 = arith.constant 19 : i32
    %252 = vector.broadcast %c19_i32 : i32 to vector<16x16xi32>
    %253 = arith.cmpi eq, %27, %252 : vector<16x16xi32>
    %c0_103 = arith.constant 0 : index
    %c0_104 = arith.constant 0 : index
    %c19 = arith.constant 19 : index
    %254 = vector.load %arg1[%c0_103, %c0_104, %c19] : memref<1x4x32xf32, #tpu.memory_space<vmem>>, vector<1x1x1xf32>
    %255 = vector.shape_cast %254 : vector<1x1x1xf32> to vector<1x1xf32>
    %256 = vector.shape_cast %255 : vector<1x1xf32> to vector<1x1xf32>
    %257 = vector.broadcast %256 : vector<1x1xf32> to vector<16x16xf32>
    %258 = arith.select %253, %257, %246 : vector<16x16xi1>, vector<16x16xf32>
    %c0_105 = arith.constant 0 : index
    %c1_106 = arith.constant 1 : index
    %c19_107 = arith.constant 19 : index
    %259 = vector.load %arg1[%c0_105, %c1_106, %c19_107] : memref<1x4x32xf32, #tpu.memory_space<vmem>>, vector<1x1x1xf32>
    %260 = vector.shape_cast %259 : vector<1x1x1xf32> to vector<1x1xf32>
    %261 = vector.shape_cast %260 : vector<1x1xf32> to vector<1x1xf32>
    %262 = vector.broadcast %261 : vector<1x1xf32> to vector<16x16xf32>
    %263 = arith.select %253, %262, %251 : vector<16x16xi1>, vector<16x16xf32>
    %c20_i32 = arith.constant 20 : i32
    %264 = vector.broadcast %c20_i32 : i32 to vector<16x16xi32>
    %265 = arith.cmpi eq, %27, %264 : vector<16x16xi32>
    %c0_108 = arith.constant 0 : index
    %c0_109 = arith.constant 0 : index
    %c20 = arith.constant 20 : index
    %266 = vector.load %arg1[%c0_108, %c0_109, %c20] : memref<1x4x32xf32, #tpu.memory_space<vmem>>, vector<1x1x1xf32>
    %267 = vector.shape_cast %266 : vector<1x1x1xf32> to vector<1x1xf32>
    %268 = vector.shape_cast %267 : vector<1x1xf32> to vector<1x1xf32>
    %269 = vector.broadcast %268 : vector<1x1xf32> to vector<16x16xf32>
    %270 = arith.select %265, %269, %258 : vector<16x16xi1>, vector<16x16xf32>
    %c0_110 = arith.constant 0 : index
    %c1_111 = arith.constant 1 : index
    %c20_112 = arith.constant 20 : index
    %271 = vector.load %arg1[%c0_110, %c1_111, %c20_112] : memref<1x4x32xf32, #tpu.memory_space<vmem>>, vector<1x1x1xf32>
    %272 = vector.shape_cast %271 : vector<1x1x1xf32> to vector<1x1xf32>
    %273 = vector.shape_cast %272 : vector<1x1xf32> to vector<1x1xf32>
    %274 = vector.broadcast %273 : vector<1x1xf32> to vector<16x16xf32>
    %275 = arith.select %265, %274, %263 : vector<16x16xi1>, vector<16x16xf32>
    %c21_i32 = arith.constant 21 : i32
    %276 = vector.broadcast %c21_i32 : i32 to vector<16x16xi32>
    %277 = arith.cmpi eq, %27, %276 : vector<16x16xi32>
    %c0_113 = arith.constant 0 : index
    %c0_114 = arith.constant 0 : index
    %c21 = arith.constant 21 : index
    %278 = vector.load %arg1[%c0_113, %c0_114, %c21] : memref<1x4x32xf32, #tpu.memory_space<vmem>>, vector<1x1x1xf32>
    %279 = vector.shape_cast %278 : vector<1x1x1xf32> to vector<1x1xf32>
    %280 = vector.shape_cast %279 : vector<1x1xf32> to vector<1x1xf32>
    %281 = vector.broadcast %280 : vector<1x1xf32> to vector<16x16xf32>
    %282 = arith.select %277, %281, %270 : vector<16x16xi1>, vector<16x16xf32>
    %c0_115 = arith.constant 0 : index
    %c1_116 = arith.constant 1 : index
    %c21_117 = arith.constant 21 : index
    %283 = vector.load %arg1[%c0_115, %c1_116, %c21_117] : memref<1x4x32xf32, #tpu.memory_space<vmem>>, vector<1x1x1xf32>
    %284 = vector.shape_cast %283 : vector<1x1x1xf32> to vector<1x1xf32>
    %285 = vector.shape_cast %284 : vector<1x1xf32> to vector<1x1xf32>
    %286 = vector.broadcast %285 : vector<1x1xf32> to vector<16x16xf32>
    %287 = arith.select %277, %286, %275 : vector<16x16xi1>, vector<16x16xf32>
    %c22_i32 = arith.constant 22 : i32
    %288 = vector.broadcast %c22_i32 : i32 to vector<16x16xi32>
    %289 = arith.cmpi eq, %27, %288 : vector<16x16xi32>
    %c0_118 = arith.constant 0 : index
    %c0_119 = arith.constant 0 : index
    %c22 = arith.constant 22 : index
    %290 = vector.load %arg1[%c0_118, %c0_119, %c22] : memref<1x4x32xf32, #tpu.memory_space<vmem>>, vector<1x1x1xf32>
    %291 = vector.shape_cast %290 : vector<1x1x1xf32> to vector<1x1xf32>
    %292 = vector.shape_cast %291 : vector<1x1xf32> to vector<1x1xf32>
    %293 = vector.broadcast %292 : vector<1x1xf32> to vector<16x16xf32>
    %294 = arith.select %289, %293, %282 : vector<16x16xi1>, vector<16x16xf32>
    %c0_120 = arith.constant 0 : index
    %c1_121 = arith.constant 1 : index
    %c22_122 = arith.constant 22 : index
    %295 = vector.load %arg1[%c0_120, %c1_121, %c22_122] : memref<1x4x32xf32, #tpu.memory_space<vmem>>, vector<1x1x1xf32>
    %296 = vector.shape_cast %295 : vector<1x1x1xf32> to vector<1x1xf32>
    %297 = vector.shape_cast %296 : vector<1x1xf32> to vector<1x1xf32>
    %298 = vector.broadcast %297 : vector<1x1xf32> to vector<16x16xf32>
    %299 = arith.select %289, %298, %287 : vector<16x16xi1>, vector<16x16xf32>
    %c23_i32 = arith.constant 23 : i32
    %300 = vector.broadcast %c23_i32 : i32 to vector<16x16xi32>
    %301 = arith.cmpi eq, %27, %300 : vector<16x16xi32>
    %c0_123 = arith.constant 0 : index
    %c0_124 = arith.constant 0 : index
    %c23 = arith.constant 23 : index
    %302 = vector.load %arg1[%c0_123, %c0_124, %c23] : memref<1x4x32xf32, #tpu.memory_space<vmem>>, vector<1x1x1xf32>
    %303 = vector.shape_cast %302 : vector<1x1x1xf32> to vector<1x1xf32>
    %304 = vector.shape_cast %303 : vector<1x1xf32> to vector<1x1xf32>
    %305 = vector.broadcast %304 : vector<1x1xf32> to vector<16x16xf32>
    %306 = arith.select %301, %305, %294 : vector<16x16xi1>, vector<16x16xf32>
    %c0_125 = arith.constant 0 : index
    %c1_126 = arith.constant 1 : index
    %c23_127 = arith.constant 23 : index
    %307 = vector.load %arg1[%c0_125, %c1_126, %c23_127] : memref<1x4x32xf32, #tpu.memory_space<vmem>>, vector<1x1x1xf32>
    %308 = vector.shape_cast %307 : vector<1x1x1xf32> to vector<1x1xf32>
    %309 = vector.shape_cast %308 : vector<1x1xf32> to vector<1x1xf32>
    %310 = vector.broadcast %309 : vector<1x1xf32> to vector<16x16xf32>
    %311 = arith.select %301, %310, %299 : vector<16x16xi1>, vector<16x16xf32>
    %c24_i32 = arith.constant 24 : i32
    %312 = vector.broadcast %c24_i32 : i32 to vector<16x16xi32>
    %313 = arith.cmpi eq, %27, %312 : vector<16x16xi32>
    %c0_128 = arith.constant 0 : index
    %c0_129 = arith.constant 0 : index
    %c24 = arith.constant 24 : index
    %314 = vector.load %arg1[%c0_128, %c0_129, %c24] : memref<1x4x32xf32, #tpu.memory_space<vmem>>, vector<1x1x1xf32>
    %315 = vector.shape_cast %314 : vector<1x1x1xf32> to vector<1x1xf32>
    %316 = vector.shape_cast %315 : vector<1x1xf32> to vector<1x1xf32>
    %317 = vector.broadcast %316 : vector<1x1xf32> to vector<16x16xf32>
    %318 = arith.select %313, %317, %306 : vector<16x16xi1>, vector<16x16xf32>
    %c0_130 = arith.constant 0 : index
    %c1_131 = arith.constant 1 : index
    %c24_132 = arith.constant 24 : index
    %319 = vector.load %arg1[%c0_130, %c1_131, %c24_132] : memref<1x4x32xf32, #tpu.memory_space<vmem>>, vector<1x1x1xf32>
    %320 = vector.shape_cast %319 : vector<1x1x1xf32> to vector<1x1xf32>
    %321 = vector.shape_cast %320 : vector<1x1xf32> to vector<1x1xf32>
    %322 = vector.broadcast %321 : vector<1x1xf32> to vector<16x16xf32>
    %323 = arith.select %313, %322, %311 : vector<16x16xi1>, vector<16x16xf32>
    %c25_i32 = arith.constant 25 : i32
    %324 = vector.broadcast %c25_i32 : i32 to vector<16x16xi32>
    %325 = arith.cmpi eq, %27, %324 : vector<16x16xi32>
    %c0_133 = arith.constant 0 : index
    %c0_134 = arith.constant 0 : index
    %c25 = arith.constant 25 : index
    %326 = vector.load %arg1[%c0_133, %c0_134, %c25] : memref<1x4x32xf32, #tpu.memory_space<vmem>>, vector<1x1x1xf32>
    %327 = vector.shape_cast %326 : vector<1x1x1xf32> to vector<1x1xf32>
    %328 = vector.shape_cast %327 : vector<1x1xf32> to vector<1x1xf32>
    %329 = vector.broadcast %328 : vector<1x1xf32> to vector<16x16xf32>
    %330 = arith.select %325, %329, %318 : vector<16x16xi1>, vector<16x16xf32>
    %c0_135 = arith.constant 0 : index
    %c1_136 = arith.constant 1 : index
    %c25_137 = arith.constant 25 : index
    %331 = vector.load %arg1[%c0_135, %c1_136, %c25_137] : memref<1x4x32xf32, #tpu.memory_space<vmem>>, vector<1x1x1xf32>
    %332 = vector.shape_cast %331 : vector<1x1x1xf32> to vector<1x1xf32>
    %333 = vector.shape_cast %332 : vector<1x1xf32> to vector<1x1xf32>
    %334 = vector.broadcast %333 : vector<1x1xf32> to vector<16x16xf32>
    %335 = arith.select %325, %334, %323 : vector<16x16xi1>, vector<16x16xf32>
    %c26_i32 = arith.constant 26 : i32
    %336 = vector.broadcast %c26_i32 : i32 to vector<16x16xi32>
    %337 = arith.cmpi eq, %27, %336 : vector<16x16xi32>
    %c0_138 = arith.constant 0 : index
    %c0_139 = arith.constant 0 : index
    %c26 = arith.constant 26 : index
    %338 = vector.load %arg1[%c0_138, %c0_139, %c26] : memref<1x4x32xf32, #tpu.memory_space<vmem>>, vector<1x1x1xf32>
    %339 = vector.shape_cast %338 : vector<1x1x1xf32> to vector<1x1xf32>
    %340 = vector.shape_cast %339 : vector<1x1xf32> to vector<1x1xf32>
    %341 = vector.broadcast %340 : vector<1x1xf32> to vector<16x16xf32>
    %342 = arith.select %337, %341, %330 : vector<16x16xi1>, vector<16x16xf32>
    %c0_140 = arith.constant 0 : index
    %c1_141 = arith.constant 1 : index
    %c26_142 = arith.constant 26 : index
    %343 = vector.load %arg1[%c0_140, %c1_141, %c26_142] : memref<1x4x32xf32, #tpu.memory_space<vmem>>, vector<1x1x1xf32>
    %344 = vector.shape_cast %343 : vector<1x1x1xf32> to vector<1x1xf32>
    %345 = vector.shape_cast %344 : vector<1x1xf32> to vector<1x1xf32>
    %346 = vector.broadcast %345 : vector<1x1xf32> to vector<16x16xf32>
    %347 = arith.select %337, %346, %335 : vector<16x16xi1>, vector<16x16xf32>
    %c27_i32 = arith.constant 27 : i32
    %348 = vector.broadcast %c27_i32 : i32 to vector<16x16xi32>
    %349 = arith.cmpi eq, %27, %348 : vector<16x16xi32>
    %c0_143 = arith.constant 0 : index
    %c0_144 = arith.constant 0 : index
    %c27 = arith.constant 27 : index
    %350 = vector.load %arg1[%c0_143, %c0_144, %c27] : memref<1x4x32xf32, #tpu.memory_space<vmem>>, vector<1x1x1xf32>
    %351 = vector.shape_cast %350 : vector<1x1x1xf32> to vector<1x1xf32>
    %352 = vector.shape_cast %351 : vector<1x1xf32> to vector<1x1xf32>
    %353 = vector.broadcast %352 : vector<1x1xf32> to vector<16x16xf32>
    %354 = arith.select %349, %353, %342 : vector<16x16xi1>, vector<16x16xf32>
    %c0_145 = arith.constant 0 : index
    %c1_146 = arith.constant 1 : index
    %c27_147 = arith.constant 27 : index
    %355 = vector.load %arg1[%c0_145, %c1_146, %c27_147] : memref<1x4x32xf32, #tpu.memory_space<vmem>>, vector<1x1x1xf32>
    %356 = vector.shape_cast %355 : vector<1x1x1xf32> to vector<1x1xf32>
    %357 = vector.shape_cast %356 : vector<1x1xf32> to vector<1x1xf32>
    %358 = vector.broadcast %357 : vector<1x1xf32> to vector<16x16xf32>
    %359 = arith.select %349, %358, %347 : vector<16x16xi1>, vector<16x16xf32>
    %c28_i32 = arith.constant 28 : i32
    %360 = vector.broadcast %c28_i32 : i32 to vector<16x16xi32>
    %361 = arith.cmpi eq, %27, %360 : vector<16x16xi32>
    %c0_148 = arith.constant 0 : index
    %c0_149 = arith.constant 0 : index
    %c28 = arith.constant 28 : index
    %362 = vector.load %arg1[%c0_148, %c0_149, %c28] : memref<1x4x32xf32, #tpu.memory_space<vmem>>, vector<1x1x1xf32>
    %363 = vector.shape_cast %362 : vector<1x1x1xf32> to vector<1x1xf32>
    %364 = vector.shape_cast %363 : vector<1x1xf32> to vector<1x1xf32>
    %365 = vector.broadcast %364 : vector<1x1xf32> to vector<16x16xf32>
    %366 = arith.select %361, %365, %354 : vector<16x16xi1>, vector<16x16xf32>
    %c0_150 = arith.constant 0 : index
    %c1_151 = arith.constant 1 : index
    %c28_152 = arith.constant 28 : index
    %367 = vector.load %arg1[%c0_150, %c1_151, %c28_152] : memref<1x4x32xf32, #tpu.memory_space<vmem>>, vector<1x1x1xf32>
    %368 = vector.shape_cast %367 : vector<1x1x1xf32> to vector<1x1xf32>
    %369 = vector.shape_cast %368 : vector<1x1xf32> to vector<1x1xf32>
    %370 = vector.broadcast %369 : vector<1x1xf32> to vector<16x16xf32>
    %371 = arith.select %361, %370, %359 : vector<16x16xi1>, vector<16x16xf32>
    %c29_i32 = arith.constant 29 : i32
    %372 = vector.broadcast %c29_i32 : i32 to vector<16x16xi32>
    %373 = arith.cmpi eq, %27, %372 : vector<16x16xi32>
    %c0_153 = arith.constant 0 : index
    %c0_154 = arith.constant 0 : index
    %c29 = arith.constant 29 : index
    %374 = vector.load %arg1[%c0_153, %c0_154, %c29] : memref<1x4x32xf32, #tpu.memory_space<vmem>>, vector<1x1x1xf32>
    %375 = vector.shape_cast %374 : vector<1x1x1xf32> to vector<1x1xf32>
    %376 = vector.shape_cast %375 : vector<1x1xf32> to vector<1x1xf32>
    %377 = vector.broadcast %376 : vector<1x1xf32> to vector<16x16xf32>
    %378 = arith.select %373, %377, %366 : vector<16x16xi1>, vector<16x16xf32>
    %c0_155 = arith.constant 0 : index
    %c1_156 = arith.constant 1 : index
    %c29_157 = arith.constant 29 : index
    %379 = vector.load %arg1[%c0_155, %c1_156, %c29_157] : memref<1x4x32xf32, #tpu.memory_space<vmem>>, vector<1x1x1xf32>
    %380 = vector.shape_cast %379 : vector<1x1x1xf32> to vector<1x1xf32>
    %381 = vector.shape_cast %380 : vector<1x1xf32> to vector<1x1xf32>
    %382 = vector.broadcast %381 : vector<1x1xf32> to vector<16x16xf32>
    %383 = arith.select %373, %382, %371 : vector<16x16xi1>, vector<16x16xf32>
    %c30_i32 = arith.constant 30 : i32
    %384 = vector.broadcast %c30_i32 : i32 to vector<16x16xi32>
    %385 = arith.cmpi eq, %27, %384 : vector<16x16xi32>
    %c0_158 = arith.constant 0 : index
    %c0_159 = arith.constant 0 : index
    %c30 = arith.constant 30 : index
    %386 = vector.load %arg1[%c0_158, %c0_159, %c30] : memref<1x4x32xf32, #tpu.memory_space<vmem>>, vector<1x1x1xf32>
    %387 = vector.shape_cast %386 : vector<1x1x1xf32> to vector<1x1xf32>
    %388 = vector.shape_cast %387 : vector<1x1xf32> to vector<1x1xf32>
    %389 = vector.broadcast %388 : vector<1x1xf32> to vector<16x16xf32>
    %390 = arith.select %385, %389, %378 : vector<16x16xi1>, vector<16x16xf32>
    %c0_160 = arith.constant 0 : index
    %c1_161 = arith.constant 1 : index
    %c30_162 = arith.constant 30 : index
    %391 = vector.load %arg1[%c0_160, %c1_161, %c30_162] : memref<1x4x32xf32, #tpu.memory_space<vmem>>, vector<1x1x1xf32>
    %392 = vector.shape_cast %391 : vector<1x1x1xf32> to vector<1x1xf32>
    %393 = vector.shape_cast %392 : vector<1x1xf32> to vector<1x1xf32>
    %394 = vector.broadcast %393 : vector<1x1xf32> to vector<16x16xf32>
    %395 = arith.select %385, %394, %383 : vector<16x16xi1>, vector<16x16xf32>
    %c31_i32 = arith.constant 31 : i32
    %396 = vector.broadcast %c31_i32 : i32 to vector<16x16xi32>
    %397 = arith.cmpi eq, %27, %396 : vector<16x16xi32>
    %c0_163 = arith.constant 0 : index
    %c0_164 = arith.constant 0 : index
    %c31 = arith.constant 31 : index
    %398 = vector.load %arg1[%c0_163, %c0_164, %c31] : memref<1x4x32xf32, #tpu.memory_space<vmem>>, vector<1x1x1xf32>
    %399 = vector.shape_cast %398 : vector<1x1x1xf32> to vector<1x1xf32>
    %400 = vector.shape_cast %399 : vector<1x1xf32> to vector<1x1xf32>
    %401 = vector.broadcast %400 : vector<1x1xf32> to vector<16x16xf32>
    %402 = arith.select %397, %401, %390 : vector<16x16xi1>, vector<16x16xf32>
    %c0_165 = arith.constant 0 : index
    %c1_166 = arith.constant 1 : index
    %c31_167 = arith.constant 31 : index
    %403 = vector.load %arg1[%c0_165, %c1_166, %c31_167] : memref<1x4x32xf32, #tpu.memory_space<vmem>>, vector<1x1x1xf32>
    %404 = vector.shape_cast %403 : vector<1x1x1xf32> to vector<1x1xf32>
    %405 = vector.shape_cast %404 : vector<1x1xf32> to vector<1x1xf32>
    %406 = vector.broadcast %405 : vector<1x1xf32> to vector<16x16xf32>
    %407 = arith.select %397, %406, %395 : vector<16x16xi1>, vector<16x16xf32>
    %c0_168 = arith.constant 0 : index
    %c0_169 = arith.constant 0 : index
    %c0_170 = arith.constant 0 : index
    %408 = vector.load %arg2[%c0_168, %c0_169, %c0_170] : memref<4x16x16xf32, #tpu.memory_space<vmem>>, vector<1x16x16xf32>
    %409 = vector.shape_cast %408 : vector<1x16x16xf32> to vector<16x16xf32>
    %410 = vector.shape_cast %402 : vector<16x16xf32> to vector<1x16x16xf32>
    tpu.vector_store %arg2[%c0_168, %c0_169, %c0_170], %410 {strides = array<i32>} : memref<4x16x16xf32, #tpu.memory_space<vmem>>, vector<1x16x16xf32>,
    %c1_171 = arith.constant 1 : index
    %c0_172 = arith.constant 0 : index
    %c0_173 = arith.constant 0 : index
    %411 = vector.load %arg2[%c1_171, %c0_172, %c0_173] : memref<4x16x16xf32, #tpu.memory_space<vmem>>, vector<1x16x16xf32>
    %412 = vector.shape_cast %411 : vector<1x16x16xf32> to vector<16x16xf32>
    %413 = vector.shape_cast %407 : vector<16x16xf32> to vector<1x16x16xf32>
    tpu.vector_store %arg2[%c1_171, %c0_172, %c0_173], %413 {strides = array<i32>} : memref<4x16x16xf32, #tpu.memory_space<vmem>>, vector<1x16x16xf32>,
    %c0_174 = arith.constant 0 : index
    %c2_175 = arith.constant 2 : index
    %c0_176 = arith.constant 0 : index
    %414 = vector.load %arg1[%c0_174, %c2_175, %c0_176] : memref<1x4x32xf32, #tpu.memory_space<vmem>>, vector<1x1x1xf32>
    %415 = vector.shape_cast %414 : vector<1x1x1xf32> to vector<1x1xf32>
    %416 = vector.shape_cast %415 : vector<1x1xf32> to vector<1x1xf32>
    %417 = vector.broadcast %416 : vector<1x1xf32> to vector<16x16xf32>
    %c0_177 = arith.constant 0 : index
    %c3_178 = arith.constant 3 : index
    %c0_179 = arith.constant 0 : index
    %418 = vector.load %arg1[%c0_177, %c3_178, %c0_179] : memref<1x4x32xf32, #tpu.memory_space<vmem>>, vector<1x1x1xf32>
    %419 = vector.shape_cast %418 : vector<1x1x1xf32> to vector<1x1xf32>
    %420 = vector.shape_cast %419 : vector<1x1xf32> to vector<1x1xf32>
    %421 = vector.broadcast %420 : vector<1x1xf32> to vector<16x16xf32>
    %c1_i32_180 = arith.constant 1 : i32
    %422 = vector.broadcast %c1_i32_180 : i32 to vector<16x16xi32>
    %423 = arith.cmpi eq, %27, %422 : vector<16x16xi32>
    %c0_181 = arith.constant 0 : index
    %c2_182 = arith.constant 2 : index
    %c1_183 = arith.constant 1 : index
    %424 = vector.load %arg1[%c0_181, %c2_182, %c1_183] : memref<1x4x32xf32, #tpu.memory_space<vmem>>, vector<1x1x1xf32>
    %425 = vector.shape_cast %424 : vector<1x1x1xf32> to vector<1x1xf32>
    %426 = vector.shape_cast %425 : vector<1x1xf32> to vector<1x1xf32>
    %427 = vector.broadcast %426 : vector<1x1xf32> to vector<16x16xf32>
    %428 = arith.select %423, %427, %417 : vector<16x16xi1>, vector<16x16xf32>
    %c0_184 = arith.constant 0 : index
    %c3_185 = arith.constant 3 : index
    %c1_186 = arith.constant 1 : index
    %429 = vector.load %arg1[%c0_184, %c3_185, %c1_186] : memref<1x4x32xf32, #tpu.memory_space<vmem>>, vector<1x1x1xf32>
    %430 = vector.shape_cast %429 : vector<1x1x1xf32> to vector<1x1xf32>
    %431 = vector.shape_cast %430 : vector<1x1xf32> to vector<1x1xf32>
    %432 = vector.broadcast %431 : vector<1x1xf32> to vector<16x16xf32>
    %433 = arith.select %423, %432, %421 : vector<16x16xi1>, vector<16x16xf32>
    %c2_i32_187 = arith.constant 2 : i32
    %434 = vector.broadcast %c2_i32_187 : i32 to vector<16x16xi32>
    %435 = arith.cmpi eq, %27, %434 : vector<16x16xi32>
    %c0_188 = arith.constant 0 : index
    %c2_189 = arith.constant 2 : index
    %c2_190 = arith.constant 2 : index
    %436 = vector.load %arg1[%c0_188, %c2_189, %c2_190] : memref<1x4x32xf32, #tpu.memory_space<vmem>>, vector<1x1x1xf32>
    %437 = vector.shape_cast %436 : vector<1x1x1xf32> to vector<1x1xf32>
    %438 = vector.shape_cast %437 : vector<1x1xf32> to vector<1x1xf32>
    %439 = vector.broadcast %438 : vector<1x1xf32> to vector<16x16xf32>
    %440 = arith.select %435, %439, %428 : vector<16x16xi1>, vector<16x16xf32>
    %c0_191 = arith.constant 0 : index
    %c3_192 = arith.constant 3 : index
    %c2_193 = arith.constant 2 : index
    %441 = vector.load %arg1[%c0_191, %c3_192, %c2_193] : memref<1x4x32xf32, #tpu.memory_space<vmem>>, vector<1x1x1xf32>
    %442 = vector.shape_cast %441 : vector<1x1x1xf32> to vector<1x1xf32>
    %443 = vector.shape_cast %442 : vector<1x1xf32> to vector<1x1xf32>
    %444 = vector.broadcast %443 : vector<1x1xf32> to vector<16x16xf32>
    %445 = arith.select %435, %444, %433 : vector<16x16xi1>, vector<16x16xf32>
    %c3_i32_194 = arith.constant 3 : i32
    %446 = vector.broadcast %c3_i32_194 : i32 to vector<16x16xi32>
    %447 = arith.cmpi eq, %27, %446 : vector<16x16xi32>
    %c0_195 = arith.constant 0 : index
    %c2_196 = arith.constant 2 : index
    %c3_197 = arith.constant 3 : index
    %448 = vector.load %arg1[%c0_195, %c2_196, %c3_197] : memref<1x4x32xf32, #tpu.memory_space<vmem>>, vector<1x1x1xf32>
    %449 = vector.shape_cast %448 : vector<1x1x1xf32> to vector<1x1xf32>
    %450 = vector.shape_cast %449 : vector<1x1xf32> to vector<1x1xf32>
    %451 = vector.broadcast %450 : vector<1x1xf32> to vector<16x16xf32>
    %452 = arith.select %447, %451, %440 : vector<16x16xi1>, vector<16x16xf32>
    %c0_198 = arith.constant 0 : index
    %c3_199 = arith.constant 3 : index
    %c3_200 = arith.constant 3 : index
    %453 = vector.load %arg1[%c0_198, %c3_199, %c3_200] : memref<1x4x32xf32, #tpu.memory_space<vmem>>, vector<1x1x1xf32>
    %454 = vector.shape_cast %453 : vector<1x1x1xf32> to vector<1x1xf32>
    %455 = vector.shape_cast %454 : vector<1x1xf32> to vector<1x1xf32>
    %456 = vector.broadcast %455 : vector<1x1xf32> to vector<16x16xf32>
    %457 = arith.select %447, %456, %445 : vector<16x16xi1>, vector<16x16xf32>
    %c4_i32_201 = arith.constant 4 : i32
    %458 = vector.broadcast %c4_i32_201 : i32 to vector<16x16xi32>
    %459 = arith.cmpi eq, %27, %458 : vector<16x16xi32>
    %c0_202 = arith.constant 0 : index
    %c2_203 = arith.constant 2 : index
    %c4_204 = arith.constant 4 : index
    %460 = vector.load %arg1[%c0_202, %c2_203, %c4_204] : memref<1x4x32xf32, #tpu.memory_space<vmem>>, vector<1x1x1xf32>
    %461 = vector.shape_cast %460 : vector<1x1x1xf32> to vector<1x1xf32>
    %462 = vector.shape_cast %461 : vector<1x1xf32> to vector<1x1xf32>
    %463 = vector.broadcast %462 : vector<1x1xf32> to vector<16x16xf32>
    %464 = arith.select %459, %463, %452 : vector<16x16xi1>, vector<16x16xf32>
    %c0_205 = arith.constant 0 : index
    %c3_206 = arith.constant 3 : index
    %c4_207 = arith.constant 4 : index
    %465 = vector.load %arg1[%c0_205, %c3_206, %c4_207] : memref<1x4x32xf32, #tpu.memory_space<vmem>>, vector<1x1x1xf32>
    %466 = vector.shape_cast %465 : vector<1x1x1xf32> to vector<1x1xf32>
    %467 = vector.shape_cast %466 : vector<1x1xf32> to vector<1x1xf32>
    %468 = vector.broadcast %467 : vector<1x1xf32> to vector<16x16xf32>
    %469 = arith.select %459, %468, %457 : vector<16x16xi1>, vector<16x16xf32>
    %c5_i32_208 = arith.constant 5 : i32
    %470 = vector.broadcast %c5_i32_208 : i32 to vector<16x16xi32>
    %471 = arith.cmpi eq, %27, %470 : vector<16x16xi32>
    %c0_209 = arith.constant 0 : index
    %c2_210 = arith.constant 2 : index
    %c5_211 = arith.constant 5 : index
    %472 = vector.load %arg1[%c0_209, %c2_210, %c5_211] : memref<1x4x32xf32, #tpu.memory_space<vmem>>, vector<1x1x1xf32>
    %473 = vector.shape_cast %472 : vector<1x1x1xf32> to vector<1x1xf32>
    %474 = vector.shape_cast %473 : vector<1x1xf32> to vector<1x1xf32>
    %475 = vector.broadcast %474 : vector<1x1xf32> to vector<16x16xf32>
    %476 = arith.select %471, %475, %464 : vector<16x16xi1>, vector<16x16xf32>
    %c0_212 = arith.constant 0 : index
    %c3_213 = arith.constant 3 : index
    %c5_214 = arith.constant 5 : index
    %477 = vector.load %arg1[%c0_212, %c3_213, %c5_214] : memref<1x4x32xf32, #tpu.memory_space<vmem>>, vector<1x1x1xf32>
    %478 = vector.shape_cast %477 : vector<1x1x1xf32> to vector<1x1xf32>
    %479 = vector.shape_cast %478 : vector<1x1xf32> to vector<1x1xf32>
    %480 = vector.broadcast %479 : vector<1x1xf32> to vector<16x16xf32>
    %481 = arith.select %471, %480, %469 : vector<16x16xi1>, vector<16x16xf32>
    %c6_i32_215 = arith.constant 6 : i32
    %482 = vector.broadcast %c6_i32_215 : i32 to vector<16x16xi32>
    %483 = arith.cmpi eq, %27, %482 : vector<16x16xi32>
    %c0_216 = arith.constant 0 : index
    %c2_217 = arith.constant 2 : index
    %c6_218 = arith.constant 6 : index
    %484 = vector.load %arg1[%c0_216, %c2_217, %c6_218] : memref<1x4x32xf32, #tpu.memory_space<vmem>>, vector<1x1x1xf32>
    %485 = vector.shape_cast %484 : vector<1x1x1xf32> to vector<1x1xf32>
    %486 = vector.shape_cast %485 : vector<1x1xf32> to vector<1x1xf32>
    %487 = vector.broadcast %486 : vector<1x1xf32> to vector<16x16xf32>
    %488 = arith.select %483, %487, %476 : vector<16x16xi1>, vector<16x16xf32>
    %c0_219 = arith.constant 0 : index
    %c3_220 = arith.constant 3 : index
    %c6_221 = arith.constant 6 : index
    %489 = vector.load %arg1[%c0_219, %c3_220, %c6_221] : memref<1x4x32xf32, #tpu.memory_space<vmem>>, vector<1x1x1xf32>
    %490 = vector.shape_cast %489 : vector<1x1x1xf32> to vector<1x1xf32>
    %491 = vector.shape_cast %490 : vector<1x1xf32> to vector<1x1xf32>
    %492 = vector.broadcast %491 : vector<1x1xf32> to vector<16x16xf32>
    %493 = arith.select %483, %492, %481 : vector<16x16xi1>, vector<16x16xf32>
    %c7_i32_222 = arith.constant 7 : i32
    %494 = vector.broadcast %c7_i32_222 : i32 to vector<16x16xi32>
    %495 = arith.cmpi eq, %27, %494 : vector<16x16xi32>
    %c0_223 = arith.constant 0 : index
    %c2_224 = arith.constant 2 : index
    %c7_225 = arith.constant 7 : index
    %496 = vector.load %arg1[%c0_223, %c2_224, %c7_225] : memref<1x4x32xf32, #tpu.memory_space<vmem>>, vector<1x1x1xf32>
    %497 = vector.shape_cast %496 : vector<1x1x1xf32> to vector<1x1xf32>
    %498 = vector.shape_cast %497 : vector<1x1xf32> to vector<1x1xf32>
    %499 = vector.broadcast %498 : vector<1x1xf32> to vector<16x16xf32>
    %500 = arith.select %495, %499, %488 : vector<16x16xi1>, vector<16x16xf32>
    %c0_226 = arith.constant 0 : index
    %c3_227 = arith.constant 3 : index
    %c7_228 = arith.constant 7 : index
    %501 = vector.load %arg1[%c0_226, %c3_227, %c7_228] : memref<1x4x32xf32, #tpu.memory_space<vmem>>, vector<1x1x1xf32>
    %502 = vector.shape_cast %501 : vector<1x1x1xf32> to vector<1x1xf32>
    %503 = vector.shape_cast %502 : vector<1x1xf32> to vector<1x1xf32>
    %504 = vector.broadcast %503 : vector<1x1xf32> to vector<16x16xf32>
    %505 = arith.select %495, %504, %493 : vector<16x16xi1>, vector<16x16xf32>
    %c8_i32_229 = arith.constant 8 : i32
    %506 = vector.broadcast %c8_i32_229 : i32 to vector<16x16xi32>
    %507 = arith.cmpi eq, %27, %506 : vector<16x16xi32>
    %c0_230 = arith.constant 0 : index
    %c2_231 = arith.constant 2 : index
    %c8_232 = arith.constant 8 : index
    %508 = vector.load %arg1[%c0_230, %c2_231, %c8_232] : memref<1x4x32xf32, #tpu.memory_space<vmem>>, vector<1x1x1xf32>
    %509 = vector.shape_cast %508 : vector<1x1x1xf32> to vector<1x1xf32>
    %510 = vector.shape_cast %509 : vector<1x1xf32> to vector<1x1xf32>
    %511 = vector.broadcast %510 : vector<1x1xf32> to vector<16x16xf32>
    %512 = arith.select %507, %511, %500 : vector<16x16xi1>, vector<16x16xf32>
    %c0_233 = arith.constant 0 : index
    %c3_234 = arith.constant 3 : index
    %c8_235 = arith.constant 8 : index
    %513 = vector.load %arg1[%c0_233, %c3_234, %c8_235] : memref<1x4x32xf32, #tpu.memory_space<vmem>>, vector<1x1x1xf32>
    %514 = vector.shape_cast %513 : vector<1x1x1xf32> to vector<1x1xf32>
    %515 = vector.shape_cast %514 : vector<1x1xf32> to vector<1x1xf32>
    %516 = vector.broadcast %515 : vector<1x1xf32> to vector<16x16xf32>
    %517 = arith.select %507, %516, %505 : vector<16x16xi1>, vector<16x16xf32>
    %c9_i32_236 = arith.constant 9 : i32
    %518 = vector.broadcast %c9_i32_236 : i32 to vector<16x16xi32>
    %519 = arith.cmpi eq, %27, %518 : vector<16x16xi32>
    %c0_237 = arith.constant 0 : index
    %c2_238 = arith.constant 2 : index
    %c9_239 = arith.constant 9 : index
    %520 = vector.load %arg1[%c0_237, %c2_238, %c9_239] : memref<1x4x32xf32, #tpu.memory_space<vmem>>, vector<1x1x1xf32>
    %521 = vector.shape_cast %520 : vector<1x1x1xf32> to vector<1x1xf32>
    %522 = vector.shape_cast %521 : vector<1x1xf32> to vector<1x1xf32>
    %523 = vector.broadcast %522 : vector<1x1xf32> to vector<16x16xf32>
    %524 = arith.select %519, %523, %512 : vector<16x16xi1>, vector<16x16xf32>
    %c0_240 = arith.constant 0 : index
    %c3_241 = arith.constant 3 : index
    %c9_242 = arith.constant 9 : index
    %525 = vector.load %arg1[%c0_240, %c3_241, %c9_242] : memref<1x4x32xf32, #tpu.memory_space<vmem>>, vector<1x1x1xf32>
    %526 = vector.shape_cast %525 : vector<1x1x1xf32> to vector<1x1xf32>
    %527 = vector.shape_cast %526 : vector<1x1xf32> to vector<1x1xf32>
    %528 = vector.broadcast %527 : vector<1x1xf32> to vector<16x16xf32>
    %529 = arith.select %519, %528, %517 : vector<16x16xi1>, vector<16x16xf32>
    %c10_i32_243 = arith.constant 10 : i32
    %530 = vector.broadcast %c10_i32_243 : i32 to vector<16x16xi32>
    %531 = arith.cmpi eq, %27, %530 : vector<16x16xi32>
    %c0_244 = arith.constant 0 : index
    %c2_245 = arith.constant 2 : index
    %c10_246 = arith.constant 10 : index
    %532 = vector.load %arg1[%c0_244, %c2_245, %c10_246] : memref<1x4x32xf32, #tpu.memory_space<vmem>>, vector<1x1x1xf32>
    %533 = vector.shape_cast %532 : vector<1x1x1xf32> to vector<1x1xf32>
    %534 = vector.shape_cast %533 : vector<1x1xf32> to vector<1x1xf32>
    %535 = vector.broadcast %534 : vector<1x1xf32> to vector<16x16xf32>
    %536 = arith.select %531, %535, %524 : vector<16x16xi1>, vector<16x16xf32>
    %c0_247 = arith.constant 0 : index
    %c3_248 = arith.constant 3 : index
    %c10_249 = arith.constant 10 : index
    %537 = vector.load %arg1[%c0_247, %c3_248, %c10_249] : memref<1x4x32xf32, #tpu.memory_space<vmem>>, vector<1x1x1xf32>
    %538 = vector.shape_cast %537 : vector<1x1x1xf32> to vector<1x1xf32>
    %539 = vector.shape_cast %538 : vector<1x1xf32> to vector<1x1xf32>
    %540 = vector.broadcast %539 : vector<1x1xf32> to vector<16x16xf32>
    %541 = arith.select %531, %540, %529 : vector<16x16xi1>, vector<16x16xf32>
    %c11_i32_250 = arith.constant 11 : i32
    %542 = vector.broadcast %c11_i32_250 : i32 to vector<16x16xi32>
    %543 = arith.cmpi eq, %27, %542 : vector<16x16xi32>
    %c0_251 = arith.constant 0 : index
    %c2_252 = arith.constant 2 : index
    %c11_253 = arith.constant 11 : index
    %544 = vector.load %arg1[%c0_251, %c2_252, %c11_253] : memref<1x4x32xf32, #tpu.memory_space<vmem>>, vector<1x1x1xf32>
    %545 = vector.shape_cast %544 : vector<1x1x1xf32> to vector<1x1xf32>
    %546 = vector.shape_cast %545 : vector<1x1xf32> to vector<1x1xf32>
    %547 = vector.broadcast %546 : vector<1x1xf32> to vector<16x16xf32>
    %548 = arith.select %543, %547, %536 : vector<16x16xi1>, vector<16x16xf32>
    %c0_254 = arith.constant 0 : index
    %c3_255 = arith.constant 3 : index
    %c11_256 = arith.constant 11 : index
    %549 = vector.load %arg1[%c0_254, %c3_255, %c11_256] : memref<1x4x32xf32, #tpu.memory_space<vmem>>, vector<1x1x1xf32>
    %550 = vector.shape_cast %549 : vector<1x1x1xf32> to vector<1x1xf32>
    %551 = vector.shape_cast %550 : vector<1x1xf32> to vector<1x1xf32>
    %552 = vector.broadcast %551 : vector<1x1xf32> to vector<16x16xf32>
    %553 = arith.select %543, %552, %541 : vector<16x16xi1>, vector<16x16xf32>
    %c12_i32_257 = arith.constant 12 : i32
    %554 = vector.broadcast %c12_i32_257 : i32 to vector<16x16xi32>
    %555 = arith.cmpi eq, %27, %554 : vector<16x16xi32>
    %c0_258 = arith.constant 0 : index
    %c2_259 = arith.constant 2 : index
    %c12_260 = arith.constant 12 : index
    %556 = vector.load %arg1[%c0_258, %c2_259, %c12_260] : memref<1x4x32xf32, #tpu.memory_space<vmem>>, vector<1x1x1xf32>
    %557 = vector.shape_cast %556 : vector<1x1x1xf32> to vector<1x1xf32>
    %558 = vector.shape_cast %557 : vector<1x1xf32> to vector<1x1xf32>
    %559 = vector.broadcast %558 : vector<1x1xf32> to vector<16x16xf32>
    %560 = arith.select %555, %559, %548 : vector<16x16xi1>, vector<16x16xf32>
    %c0_261 = arith.constant 0 : index
    %c3_262 = arith.constant 3 : index
    %c12_263 = arith.constant 12 : index
    %561 = vector.load %arg1[%c0_261, %c3_262, %c12_263] : memref<1x4x32xf32, #tpu.memory_space<vmem>>, vector<1x1x1xf32>
    %562 = vector.shape_cast %561 : vector<1x1x1xf32> to vector<1x1xf32>
    %563 = vector.shape_cast %562 : vector<1x1xf32> to vector<1x1xf32>
    %564 = vector.broadcast %563 : vector<1x1xf32> to vector<16x16xf32>
    %565 = arith.select %555, %564, %553 : vector<16x16xi1>, vector<16x16xf32>
    %c13_i32_264 = arith.constant 13 : i32
    %566 = vector.broadcast %c13_i32_264 : i32 to vector<16x16xi32>
    %567 = arith.cmpi eq, %27, %566 : vector<16x16xi32>
    %c0_265 = arith.constant 0 : index
    %c2_266 = arith.constant 2 : index
    %c13_267 = arith.constant 13 : index
    %568 = vector.load %arg1[%c0_265, %c2_266, %c13_267] : memref<1x4x32xf32, #tpu.memory_space<vmem>>, vector<1x1x1xf32>
    %569 = vector.shape_cast %568 : vector<1x1x1xf32> to vector<1x1xf32>
    %570 = vector.shape_cast %569 : vector<1x1xf32> to vector<1x1xf32>
    %571 = vector.broadcast %570 : vector<1x1xf32> to vector<16x16xf32>
    %572 = arith.select %567, %571, %560 : vector<16x16xi1>, vector<16x16xf32>
    %c0_268 = arith.constant 0 : index
    %c3_269 = arith.constant 3 : index
    %c13_270 = arith.constant 13 : index
    %573 = vector.load %arg1[%c0_268, %c3_269, %c13_270] : memref<1x4x32xf32, #tpu.memory_space<vmem>>, vector<1x1x1xf32>
    %574 = vector.shape_cast %573 : vector<1x1x1xf32> to vector<1x1xf32>
    %575 = vector.shape_cast %574 : vector<1x1xf32> to vector<1x1xf32>
    %576 = vector.broadcast %575 : vector<1x1xf32> to vector<16x16xf32>
    %577 = arith.select %567, %576, %565 : vector<16x16xi1>, vector<16x16xf32>
    %c14_i32_271 = arith.constant 14 : i32
    %578 = vector.broadcast %c14_i32_271 : i32 to vector<16x16xi32>
    %579 = arith.cmpi eq, %27, %578 : vector<16x16xi32>
    %c0_272 = arith.constant 0 : index
    %c2_273 = arith.constant 2 : index
    %c14_274 = arith.constant 14 : index
    %580 = vector.load %arg1[%c0_272, %c2_273, %c14_274] : memref<1x4x32xf32, #tpu.memory_space<vmem>>, vector<1x1x1xf32>
    %581 = vector.shape_cast %580 : vector<1x1x1xf32> to vector<1x1xf32>
    %582 = vector.shape_cast %581 : vector<1x1xf32> to vector<1x1xf32>
    %583 = vector.broadcast %582 : vector<1x1xf32> to vector<16x16xf32>
    %584 = arith.select %579, %583, %572 : vector<16x16xi1>, vector<16x16xf32>
    %c0_275 = arith.constant 0 : index
    %c3_276 = arith.constant 3 : index
    %c14_277 = arith.constant 14 : index
    %585 = vector.load %arg1[%c0_275, %c3_276, %c14_277] : memref<1x4x32xf32, #tpu.memory_space<vmem>>, vector<1x1x1xf32>
    %586 = vector.shape_cast %585 : vector<1x1x1xf32> to vector<1x1xf32>
    %587 = vector.shape_cast %586 : vector<1x1xf32> to vector<1x1xf32>
    %588 = vector.broadcast %587 : vector<1x1xf32> to vector<16x16xf32>
    %589 = arith.select %579, %588, %577 : vector<16x16xi1>, vector<16x16xf32>
    %c15_i32_278 = arith.constant 15 : i32
    %590 = vector.broadcast %c15_i32_278 : i32 to vector<16x16xi32>
    %591 = arith.cmpi eq, %27, %590 : vector<16x16xi32>
    %c0_279 = arith.constant 0 : index
    %c2_280 = arith.constant 2 : index
    %c15_281 = arith.constant 15 : index
    %592 = vector.load %arg1[%c0_279, %c2_280, %c15_281] : memref<1x4x32xf32, #tpu.memory_space<vmem>>, vector<1x1x1xf32>
    %593 = vector.shape_cast %592 : vector<1x1x1xf32> to vector<1x1xf32>
    %594 = vector.shape_cast %593 : vector<1x1xf32> to vector<1x1xf32>
    %595 = vector.broadcast %594 : vector<1x1xf32> to vector<16x16xf32>
    %596 = arith.select %591, %595, %584 : vector<16x16xi1>, vector<16x16xf32>
    %c0_282 = arith.constant 0 : index
    %c3_283 = arith.constant 3 : index
    %c15_284 = arith.constant 15 : index
    %597 = vector.load %arg1[%c0_282, %c3_283, %c15_284] : memref<1x4x32xf32, #tpu.memory_space<vmem>>, vector<1x1x1xf32>
    %598 = vector.shape_cast %597 : vector<1x1x1xf32> to vector<1x1xf32>
    %599 = vector.shape_cast %598 : vector<1x1xf32> to vector<1x1xf32>
    %600 = vector.broadcast %599 : vector<1x1xf32> to vector<16x16xf32>
    %601 = arith.select %591, %600, %589 : vector<16x16xi1>, vector<16x16xf32>
    %c16_i32_285 = arith.constant 16 : i32
    %602 = vector.broadcast %c16_i32_285 : i32 to vector<16x16xi32>
    %603 = arith.cmpi eq, %27, %602 : vector<16x16xi32>
    %c0_286 = arith.constant 0 : index
    %c2_287 = arith.constant 2 : index
    %c16_288 = arith.constant 16 : index
    %604 = vector.load %arg1[%c0_286, %c2_287, %c16_288] : memref<1x4x32xf32, #tpu.memory_space<vmem>>, vector<1x1x1xf32>
    %605 = vector.shape_cast %604 : vector<1x1x1xf32> to vector<1x1xf32>
    %606 = vector.shape_cast %605 : vector<1x1xf32> to vector<1x1xf32>
    %607 = vector.broadcast %606 : vector<1x1xf32> to vector<16x16xf32>
    %608 = arith.select %603, %607, %596 : vector<16x16xi1>, vector<16x16xf32>
    %c0_289 = arith.constant 0 : index
    %c3_290 = arith.constant 3 : index
    %c16_291 = arith.constant 16 : index
    %609 = vector.load %arg1[%c0_289, %c3_290, %c16_291] : memref<1x4x32xf32, #tpu.memory_space<vmem>>, vector<1x1x1xf32>
    %610 = vector.shape_cast %609 : vector<1x1x1xf32> to vector<1x1xf32>
    %611 = vector.shape_cast %610 : vector<1x1xf32> to vector<1x1xf32>
    %612 = vector.broadcast %611 : vector<1x1xf32> to vector<16x16xf32>
    %613 = arith.select %603, %612, %601 : vector<16x16xi1>, vector<16x16xf32>
    %c17_i32_292 = arith.constant 17 : i32
    %614 = vector.broadcast %c17_i32_292 : i32 to vector<16x16xi32>
    %615 = arith.cmpi eq, %27, %614 : vector<16x16xi32>
    %c0_293 = arith.constant 0 : index
    %c2_294 = arith.constant 2 : index
    %c17_295 = arith.constant 17 : index
    %616 = vector.load %arg1[%c0_293, %c2_294, %c17_295] : memref<1x4x32xf32, #tpu.memory_space<vmem>>, vector<1x1x1xf32>
    %617 = vector.shape_cast %616 : vector<1x1x1xf32> to vector<1x1xf32>
    %618 = vector.shape_cast %617 : vector<1x1xf32> to vector<1x1xf32>
    %619 = vector.broadcast %618 : vector<1x1xf32> to vector<16x16xf32>
    %620 = arith.select %615, %619, %608 : vector<16x16xi1>, vector<16x16xf32>
    %c0_296 = arith.constant 0 : index
    %c3_297 = arith.constant 3 : index
    %c17_298 = arith.constant 17 : index
    %621 = vector.load %arg1[%c0_296, %c3_297, %c17_298] : memref<1x4x32xf32, #tpu.memory_space<vmem>>, vector<1x1x1xf32>
    %622 = vector.shape_cast %621 : vector<1x1x1xf32> to vector<1x1xf32>
    %623 = vector.shape_cast %622 : vector<1x1xf32> to vector<1x1xf32>
    %624 = vector.broadcast %623 : vector<1x1xf32> to vector<16x16xf32>
    %625 = arith.select %615, %624, %613 : vector<16x16xi1>, vector<16x16xf32>
    %c18_i32_299 = arith.constant 18 : i32
    %626 = vector.broadcast %c18_i32_299 : i32 to vector<16x16xi32>
    %627 = arith.cmpi eq, %27, %626 : vector<16x16xi32>
    %c0_300 = arith.constant 0 : index
    %c2_301 = arith.constant 2 : index
    %c18_302 = arith.constant 18 : index
    %628 = vector.load %arg1[%c0_300, %c2_301, %c18_302] : memref<1x4x32xf32, #tpu.memory_space<vmem>>, vector<1x1x1xf32>
    %629 = vector.shape_cast %628 : vector<1x1x1xf32> to vector<1x1xf32>
    %630 = vector.shape_cast %629 : vector<1x1xf32> to vector<1x1xf32>
    %631 = vector.broadcast %630 : vector<1x1xf32> to vector<16x16xf32>
    %632 = arith.select %627, %631, %620 : vector<16x16xi1>, vector<16x16xf32>
    %c0_303 = arith.constant 0 : index
    %c3_304 = arith.constant 3 : index
    %c18_305 = arith.constant 18 : index
    %633 = vector.load %arg1[%c0_303, %c3_304, %c18_305] : memref<1x4x32xf32, #tpu.memory_space<vmem>>, vector<1x1x1xf32>
    %634 = vector.shape_cast %633 : vector<1x1x1xf32> to vector<1x1xf32>
    %635 = vector.shape_cast %634 : vector<1x1xf32> to vector<1x1xf32>
    %636 = vector.broadcast %635 : vector<1x1xf32> to vector<16x16xf32>
    %637 = arith.select %627, %636, %625 : vector<16x16xi1>, vector<16x16xf32>
    %c19_i32_306 = arith.constant 19 : i32
    %638 = vector.broadcast %c19_i32_306 : i32 to vector<16x16xi32>
    %639 = arith.cmpi eq, %27, %638 : vector<16x16xi32>
    %c0_307 = arith.constant 0 : index
    %c2_308 = arith.constant 2 : index
    %c19_309 = arith.constant 19 : index
    %640 = vector.load %arg1[%c0_307, %c2_308, %c19_309] : memref<1x4x32xf32, #tpu.memory_space<vmem>>, vector<1x1x1xf32>
    %641 = vector.shape_cast %640 : vector<1x1x1xf32> to vector<1x1xf32>
    %642 = vector.shape_cast %641 : vector<1x1xf32> to vector<1x1xf32>
    %643 = vector.broadcast %642 : vector<1x1xf32> to vector<16x16xf32>
    %644 = arith.select %639, %643, %632 : vector<16x16xi1>, vector<16x16xf32>
    %c0_310 = arith.constant 0 : index
    %c3_311 = arith.constant 3 : index
    %c19_312 = arith.constant 19 : index
    %645 = vector.load %arg1[%c0_310, %c3_311, %c19_312] : memref<1x4x32xf32, #tpu.memory_space<vmem>>, vector<1x1x1xf32>
    %646 = vector.shape_cast %645 : vector<1x1x1xf32> to vector<1x1xf32>
    %647 = vector.shape_cast %646 : vector<1x1xf32> to vector<1x1xf32>
    %648 = vector.broadcast %647 : vector<1x1xf32> to vector<16x16xf32>
    %649 = arith.select %639, %648, %637 : vector<16x16xi1>, vector<16x16xf32>
    %c20_i32_313 = arith.constant 20 : i32
    %650 = vector.broadcast %c20_i32_313 : i32 to vector<16x16xi32>
    %651 = arith.cmpi eq, %27, %650 : vector<16x16xi32>
    %c0_314 = arith.constant 0 : index
    %c2_315 = arith.constant 2 : index
    %c20_316 = arith.constant 20 : index
    %652 = vector.load %arg1[%c0_314, %c2_315, %c20_316] : memref<1x4x32xf32, #tpu.memory_space<vmem>>, vector<1x1x1xf32>
    %653 = vector.shape_cast %652 : vector<1x1x1xf32> to vector<1x1xf32>
    %654 = vector.shape_cast %653 : vector<1x1xf32> to vector<1x1xf32>
    %655 = vector.broadcast %654 : vector<1x1xf32> to vector<16x16xf32>
    %656 = arith.select %651, %655, %644 : vector<16x16xi1>, vector<16x16xf32>
    %c0_317 = arith.constant 0 : index
    %c3_318 = arith.constant 3 : index
    %c20_319 = arith.constant 20 : index
    %657 = vector.load %arg1[%c0_317, %c3_318, %c20_319] : memref<1x4x32xf32, #tpu.memory_space<vmem>>, vector<1x1x1xf32>
    %658 = vector.shape_cast %657 : vector<1x1x1xf32> to vector<1x1xf32>
    %659 = vector.shape_cast %658 : vector<1x1xf32> to vector<1x1xf32>
    %660 = vector.broadcast %659 : vector<1x1xf32> to vector<16x16xf32>
    %661 = arith.select %651, %660, %649 : vector<16x16xi1>, vector<16x16xf32>
    %c21_i32_320 = arith.constant 21 : i32
    %662 = vector.broadcast %c21_i32_320 : i32 to vector<16x16xi32>
    %663 = arith.cmpi eq, %27, %662 : vector<16x16xi32>
    %c0_321 = arith.constant 0 : index
    %c2_322 = arith.constant 2 : index
    %c21_323 = arith.constant 21 : index
    %664 = vector.load %arg1[%c0_321, %c2_322, %c21_323] : memref<1x4x32xf32, #tpu.memory_space<vmem>>, vector<1x1x1xf32>
    %665 = vector.shape_cast %664 : vector<1x1x1xf32> to vector<1x1xf32>
    %666 = vector.shape_cast %665 : vector<1x1xf32> to vector<1x1xf32>
    %667 = vector.broadcast %666 : vector<1x1xf32> to vector<16x16xf32>
    %668 = arith.select %663, %667, %656 : vector<16x16xi1>, vector<16x16xf32>
    %c0_324 = arith.constant 0 : index
    %c3_325 = arith.constant 3 : index
    %c21_326 = arith.constant 21 : index
    %669 = vector.load %arg1[%c0_324, %c3_325, %c21_326] : memref<1x4x32xf32, #tpu.memory_space<vmem>>, vector<1x1x1xf32>
    %670 = vector.shape_cast %669 : vector<1x1x1xf32> to vector<1x1xf32>
    %671 = vector.shape_cast %670 : vector<1x1xf32> to vector<1x1xf32>
    %672 = vector.broadcast %671 : vector<1x1xf32> to vector<16x16xf32>
    %673 = arith.select %663, %672, %661 : vector<16x16xi1>, vector<16x16xf32>
    %c22_i32_327 = arith.constant 22 : i32
    %674 = vector.broadcast %c22_i32_327 : i32 to vector<16x16xi32>
    %675 = arith.cmpi eq, %27, %674 : vector<16x16xi32>
    %c0_328 = arith.constant 0 : index
    %c2_329 = arith.constant 2 : index
    %c22_330 = arith.constant 22 : index
    %676 = vector.load %arg1[%c0_328, %c2_329, %c22_330] : memref<1x4x32xf32, #tpu.memory_space<vmem>>, vector<1x1x1xf32>
    %677 = vector.shape_cast %676 : vector<1x1x1xf32> to vector<1x1xf32>
    %678 = vector.shape_cast %677 : vector<1x1xf32> to vector<1x1xf32>
    %679 = vector.broadcast %678 : vector<1x1xf32> to vector<16x16xf32>
    %680 = arith.select %675, %679, %668 : vector<16x16xi1>, vector<16x16xf32>
    %c0_331 = arith.constant 0 : index
    %c3_332 = arith.constant 3 : index
    %c22_333 = arith.constant 22 : index
    %681 = vector.load %arg1[%c0_331, %c3_332, %c22_333] : memref<1x4x32xf32, #tpu.memory_space<vmem>>, vector<1x1x1xf32>
    %682 = vector.shape_cast %681 : vector<1x1x1xf32> to vector<1x1xf32>
    %683 = vector.shape_cast %682 : vector<1x1xf32> to vector<1x1xf32>
    %684 = vector.broadcast %683 : vector<1x1xf32> to vector<16x16xf32>
    %685 = arith.select %675, %684, %673 : vector<16x16xi1>, vector<16x16xf32>
    %c23_i32_334 = arith.constant 23 : i32
    %686 = vector.broadcast %c23_i32_334 : i32 to vector<16x16xi32>
    %687 = arith.cmpi eq, %27, %686 : vector<16x16xi32>
    %c0_335 = arith.constant 0 : index
    %c2_336 = arith.constant 2 : index
    %c23_337 = arith.constant 23 : index
    %688 = vector.load %arg1[%c0_335, %c2_336, %c23_337] : memref<1x4x32xf32, #tpu.memory_space<vmem>>, vector<1x1x1xf32>
    %689 = vector.shape_cast %688 : vector<1x1x1xf32> to vector<1x1xf32>
    %690 = vector.shape_cast %689 : vector<1x1xf32> to vector<1x1xf32>
    %691 = vector.broadcast %690 : vector<1x1xf32> to vector<16x16xf32>
    %692 = arith.select %687, %691, %680 : vector<16x16xi1>, vector<16x16xf32>
    %c0_338 = arith.constant 0 : index
    %c3_339 = arith.constant 3 : index
    %c23_340 = arith.constant 23 : index
    %693 = vector.load %arg1[%c0_338, %c3_339, %c23_340] : memref<1x4x32xf32, #tpu.memory_space<vmem>>, vector<1x1x1xf32>
    %694 = vector.shape_cast %693 : vector<1x1x1xf32> to vector<1x1xf32>
    %695 = vector.shape_cast %694 : vector<1x1xf32> to vector<1x1xf32>
    %696 = vector.broadcast %695 : vector<1x1xf32> to vector<16x16xf32>
    %697 = arith.select %687, %696, %685 : vector<16x16xi1>, vector<16x16xf32>
    %c24_i32_341 = arith.constant 24 : i32
    %698 = vector.broadcast %c24_i32_341 : i32 to vector<16x16xi32>
    %699 = arith.cmpi eq, %27, %698 : vector<16x16xi32>
    %c0_342 = arith.constant 0 : index
    %c2_343 = arith.constant 2 : index
    %c24_344 = arith.constant 24 : index
    %700 = vector.load %arg1[%c0_342, %c2_343, %c24_344] : memref<1x4x32xf32, #tpu.memory_space<vmem>>, vector<1x1x1xf32>
    %701 = vector.shape_cast %700 : vector<1x1x1xf32> to vector<1x1xf32>
    %702 = vector.shape_cast %701 : vector<1x1xf32> to vector<1x1xf32>
    %703 = vector.broadcast %702 : vector<1x1xf32> to vector<16x16xf32>
    %704 = arith.select %699, %703, %692 : vector<16x16xi1>, vector<16x16xf32>
    %c0_345 = arith.constant 0 : index
    %c3_346 = arith.constant 3 : index
    %c24_347 = arith.constant 24 : index
    %705 = vector.load %arg1[%c0_345, %c3_346, %c24_347] : memref<1x4x32xf32, #tpu.memory_space<vmem>>, vector<1x1x1xf32>
    %706 = vector.shape_cast %705 : vector<1x1x1xf32> to vector<1x1xf32>
    %707 = vector.shape_cast %706 : vector<1x1xf32> to vector<1x1xf32>
    %708 = vector.broadcast %707 : vector<1x1xf32> to vector<16x16xf32>
    %709 = arith.select %699, %708, %697 : vector<16x16xi1>, vector<16x16xf32>
    %c25_i32_348 = arith.constant 25 : i32
    %710 = vector.broadcast %c25_i32_348 : i32 to vector<16x16xi32>
    %711 = arith.cmpi eq, %27, %710 : vector<16x16xi32>
    %c0_349 = arith.constant 0 : index
    %c2_350 = arith.constant 2 : index
    %c25_351 = arith.constant 25 : index
    %712 = vector.load %arg1[%c0_349, %c2_350, %c25_351] : memref<1x4x32xf32, #tpu.memory_space<vmem>>, vector<1x1x1xf32>
    %713 = vector.shape_cast %712 : vector<1x1x1xf32> to vector<1x1xf32>
    %714 = vector.shape_cast %713 : vector<1x1xf32> to vector<1x1xf32>
    %715 = vector.broadcast %714 : vector<1x1xf32> to vector<16x16xf32>
    %716 = arith.select %711, %715, %704 : vector<16x16xi1>, vector<16x16xf32>
    %c0_352 = arith.constant 0 : index
    %c3_353 = arith.constant 3 : index
    %c25_354 = arith.constant 25 : index
    %717 = vector.load %arg1[%c0_352, %c3_353, %c25_354] : memref<1x4x32xf32, #tpu.memory_space<vmem>>, vector<1x1x1xf32>
    %718 = vector.shape_cast %717 : vector<1x1x1xf32> to vector<1x1xf32>
    %719 = vector.shape_cast %718 : vector<1x1xf32> to vector<1x1xf32>
    %720 = vector.broadcast %719 : vector<1x1xf32> to vector<16x16xf32>
    %721 = arith.select %711, %720, %709 : vector<16x16xi1>, vector<16x16xf32>
    %c26_i32_355 = arith.constant 26 : i32
    %722 = vector.broadcast %c26_i32_355 : i32 to vector<16x16xi32>
    %723 = arith.cmpi eq, %27, %722 : vector<16x16xi32>
    %c0_356 = arith.constant 0 : index
    %c2_357 = arith.constant 2 : index
    %c26_358 = arith.constant 26 : index
    %724 = vector.load %arg1[%c0_356, %c2_357, %c26_358] : memref<1x4x32xf32, #tpu.memory_space<vmem>>, vector<1x1x1xf32>
    %725 = vector.shape_cast %724 : vector<1x1x1xf32> to vector<1x1xf32>
    %726 = vector.shape_cast %725 : vector<1x1xf32> to vector<1x1xf32>
    %727 = vector.broadcast %726 : vector<1x1xf32> to vector<16x16xf32>
    %728 = arith.select %723, %727, %716 : vector<16x16xi1>, vector<16x16xf32>
    %c0_359 = arith.constant 0 : index
    %c3_360 = arith.constant 3 : index
    %c26_361 = arith.constant 26 : index
    %729 = vector.load %arg1[%c0_359, %c3_360, %c26_361] : memref<1x4x32xf32, #tpu.memory_space<vmem>>, vector<1x1x1xf32>
    %730 = vector.shape_cast %729 : vector<1x1x1xf32> to vector<1x1xf32>
    %731 = vector.shape_cast %730 : vector<1x1xf32> to vector<1x1xf32>
    %732 = vector.broadcast %731 : vector<1x1xf32> to vector<16x16xf32>
    %733 = arith.select %723, %732, %721 : vector<16x16xi1>, vector<16x16xf32>
    %c27_i32_362 = arith.constant 27 : i32
    %734 = vector.broadcast %c27_i32_362 : i32 to vector<16x16xi32>
    %735 = arith.cmpi eq, %27, %734 : vector<16x16xi32>
    %c0_363 = arith.constant 0 : index
    %c2_364 = arith.constant 2 : index
    %c27_365 = arith.constant 27 : index
    %736 = vector.load %arg1[%c0_363, %c2_364, %c27_365] : memref<1x4x32xf32, #tpu.memory_space<vmem>>, vector<1x1x1xf32>
    %737 = vector.shape_cast %736 : vector<1x1x1xf32> to vector<1x1xf32>
    %738 = vector.shape_cast %737 : vector<1x1xf32> to vector<1x1xf32>
    %739 = vector.broadcast %738 : vector<1x1xf32> to vector<16x16xf32>
    %740 = arith.select %735, %739, %728 : vector<16x16xi1>, vector<16x16xf32>
    %c0_366 = arith.constant 0 : index
    %c3_367 = arith.constant 3 : index
    %c27_368 = arith.constant 27 : index
    %741 = vector.load %arg1[%c0_366, %c3_367, %c27_368] : memref<1x4x32xf32, #tpu.memory_space<vmem>>, vector<1x1x1xf32>
    %742 = vector.shape_cast %741 : vector<1x1x1xf32> to vector<1x1xf32>
    %743 = vector.shape_cast %742 : vector<1x1xf32> to vector<1x1xf32>
    %744 = vector.broadcast %743 : vector<1x1xf32> to vector<16x16xf32>
    %745 = arith.select %735, %744, %733 : vector<16x16xi1>, vector<16x16xf32>
    %c28_i32_369 = arith.constant 28 : i32
    %746 = vector.broadcast %c28_i32_369 : i32 to vector<16x16xi32>
    %747 = arith.cmpi eq, %27, %746 : vector<16x16xi32>
    %c0_370 = arith.constant 0 : index
    %c2_371 = arith.constant 2 : index
    %c28_372 = arith.constant 28 : index
    %748 = vector.load %arg1[%c0_370, %c2_371, %c28_372] : memref<1x4x32xf32, #tpu.memory_space<vmem>>, vector<1x1x1xf32>
    %749 = vector.shape_cast %748 : vector<1x1x1xf32> to vector<1x1xf32>
    %750 = vector.shape_cast %749 : vector<1x1xf32> to vector<1x1xf32>
    %751 = vector.broadcast %750 : vector<1x1xf32> to vector<16x16xf32>
    %752 = arith.select %747, %751, %740 : vector<16x16xi1>, vector<16x16xf32>
    %c0_373 = arith.constant 0 : index
    %c3_374 = arith.constant 3 : index
    %c28_375 = arith.constant 28 : index
    %753 = vector.load %arg1[%c0_373, %c3_374, %c28_375] : memref<1x4x32xf32, #tpu.memory_space<vmem>>, vector<1x1x1xf32>
    %754 = vector.shape_cast %753 : vector<1x1x1xf32> to vector<1x1xf32>
    %755 = vector.shape_cast %754 : vector<1x1xf32> to vector<1x1xf32>
    %756 = vector.broadcast %755 : vector<1x1xf32> to vector<16x16xf32>
    %757 = arith.select %747, %756, %745 : vector<16x16xi1>, vector<16x16xf32>
    %c29_i32_376 = arith.constant 29 : i32
    %758 = vector.broadcast %c29_i32_376 : i32 to vector<16x16xi32>
    %759 = arith.cmpi eq, %27, %758 : vector<16x16xi32>
    %c0_377 = arith.constant 0 : index
    %c2_378 = arith.constant 2 : index
    %c29_379 = arith.constant 29 : index
    %760 = vector.load %arg1[%c0_377, %c2_378, %c29_379] : memref<1x4x32xf32, #tpu.memory_space<vmem>>, vector<1x1x1xf32>
    %761 = vector.shape_cast %760 : vector<1x1x1xf32> to vector<1x1xf32>
    %762 = vector.shape_cast %761 : vector<1x1xf32> to vector<1x1xf32>
    %763 = vector.broadcast %762 : vector<1x1xf32> to vector<16x16xf32>
    %764 = arith.select %759, %763, %752 : vector<16x16xi1>, vector<16x16xf32>
    %c0_380 = arith.constant 0 : index
    %c3_381 = arith.constant 3 : index
    %c29_382 = arith.constant 29 : index
    %765 = vector.load %arg1[%c0_380, %c3_381, %c29_382] : memref<1x4x32xf32, #tpu.memory_space<vmem>>, vector<1x1x1xf32>
    %766 = vector.shape_cast %765 : vector<1x1x1xf32> to vector<1x1xf32>
    %767 = vector.shape_cast %766 : vector<1x1xf32> to vector<1x1xf32>
    %768 = vector.broadcast %767 : vector<1x1xf32> to vector<16x16xf32>
    %769 = arith.select %759, %768, %757 : vector<16x16xi1>, vector<16x16xf32>
    %c30_i32_383 = arith.constant 30 : i32
    %770 = vector.broadcast %c30_i32_383 : i32 to vector<16x16xi32>
    %771 = arith.cmpi eq, %27, %770 : vector<16x16xi32>
    %c0_384 = arith.constant 0 : index
    %c2_385 = arith.constant 2 : index
    %c30_386 = arith.constant 30 : index
    %772 = vector.load %arg1[%c0_384, %c2_385, %c30_386] : memref<1x4x32xf32, #tpu.memory_space<vmem>>, vector<1x1x1xf32>
    %773 = vector.shape_cast %772 : vector<1x1x1xf32> to vector<1x1xf32>
    %774 = vector.shape_cast %773 : vector<1x1xf32> to vector<1x1xf32>
    %775 = vector.broadcast %774 : vector<1x1xf32> to vector<16x16xf32>
    %776 = arith.select %771, %775, %764 : vector<16x16xi1>, vector<16x16xf32>
    %c0_387 = arith.constant 0 : index
    %c3_388 = arith.constant 3 : index
    %c30_389 = arith.constant 30 : index
    %777 = vector.load %arg1[%c0_387, %c3_388, %c30_389] : memref<1x4x32xf32, #tpu.memory_space<vmem>>, vector<1x1x1xf32>
    %778 = vector.shape_cast %777 : vector<1x1x1xf32> to vector<1x1xf32>
    %779 = vector.shape_cast %778 : vector<1x1xf32> to vector<1x1xf32>
    %780 = vector.broadcast %779 : vector<1x1xf32> to vector<16x16xf32>
    %781 = arith.select %771, %780, %769 : vector<16x16xi1>, vector<16x16xf32>
    %c31_i32_390 = arith.constant 31 : i32
    %782 = vector.broadcast %c31_i32_390 : i32 to vector<16x16xi32>
    %783 = arith.cmpi eq, %27, %782 : vector<16x16xi32>
    %c0_391 = arith.constant 0 : index
    %c2_392 = arith.constant 2 : index
    %c31_393 = arith.constant 31 : index
    %784 = vector.load %arg1[%c0_391, %c2_392, %c31_393] : memref<1x4x32xf32, #tpu.memory_space<vmem>>, vector<1x1x1xf32>
    %785 = vector.shape_cast %784 : vector<1x1x1xf32> to vector<1x1xf32>
    %786 = vector.shape_cast %785 : vector<1x1xf32> to vector<1x1xf32>
    %787 = vector.broadcast %786 : vector<1x1xf32> to vector<16x16xf32>
    %788 = arith.select %783, %787, %776 : vector<16x16xi1>, vector<16x16xf32>
    %c0_394 = arith.constant 0 : index
    %c3_395 = arith.constant 3 : index
    %c31_396 = arith.constant 31 : index
    %789 = vector.load %arg1[%c0_394, %c3_395, %c31_396] : memref<1x4x32xf32, #tpu.memory_space<vmem>>, vector<1x1x1xf32>
    %790 = vector.shape_cast %789 : vector<1x1x1xf32> to vector<1x1xf32>
    %791 = vector.shape_cast %790 : vector<1x1xf32> to vector<1x1xf32>
    %792 = vector.broadcast %791 : vector<1x1xf32> to vector<16x16xf32>
    %793 = arith.select %783, %792, %781 : vector<16x16xi1>, vector<16x16xf32>
    %c2_397 = arith.constant 2 : index
    %c0_398 = arith.constant 0 : index
    %c0_399 = arith.constant 0 : index
    %794 = vector.load %arg2[%c2_397, %c0_398, %c0_399] : memref<4x16x16xf32, #tpu.memory_space<vmem>>, vector<1x16x16xf32>
    %795 = vector.shape_cast %794 : vector<1x16x16xf32> to vector<16x16xf32>
    %796 = vector.shape_cast %788 : vector<16x16xf32> to vector<1x16x16xf32>
    tpu.vector_store %arg2[%c2_397, %c0_398, %c0_399], %796 {strides = array<i32>} : memref<4x16x16xf32, #tpu.memory_space<vmem>>, vector<1x16x16xf32>,
    %c3_400 = arith.constant 3 : index
    %c0_401 = arith.constant 0 : index
    %c0_402 = arith.constant 0 : index
    %797 = vector.load %arg2[%c3_400, %c0_401, %c0_402] : memref<4x16x16xf32, #tpu.memory_space<vmem>>, vector<1x16x16xf32>
    %798 = vector.shape_cast %797 : vector<1x16x16xf32> to vector<16x16xf32>
    %799 = vector.shape_cast %793 : vector<16x16xf32> to vector<1x16x16xf32>
    tpu.vector_store %arg2[%c3_400, %c0_401, %c0_402], %799 {strides = array<i32>} : memref<4x16x16xf32, #tpu.memory_space<vmem>>, vector<1x16x16xf32>,
    return
  }
  func.func @transform_0(%arg0: i32) -> (i32, i32, i32) {
    %c0_i32 = arith.constant 0 : i32
    %c0_i32_0 = arith.constant 0 : i32
    %c0_i32_1 = arith.constant 0 : i32
    return %arg0, %c0_i32, %c0_i32_0 : i32, i32, i32
  }
  func.func @transform_1(%arg0: i32) -> (i32, i32, i32) {
    %c0_i32 = arith.constant 0 : i32
    %c0_i32_0 = arith.constant 0 : i32
    %c0_i32_1 = arith.constant 0 : i32
    return %arg0, %c0_i32, %c0_i32_0 : i32, i32, i32
  }
}

</mosaic_0001>

<llo_original>
// kernel: tpu_custom_call.1
$region0: #{tpu_custom_call.1}
  #allocation0 [shape = 'u32[]', space=smem, size = 0x4, offset = 0x4, fixed_abs, tag = 'smem constant byte address 0x4 - core index']
  #allocation1 [shape = 'u32[144,128]{1,0:T(1,128)}', space=vmem, size = 0x12000, scoped, tag = 'internal scratch']
  %s0 = inlined_call_operand.hbm [shape: f32[2,4,32], index: 0, kind: input, shape index: {}]
  %s1 = inlined_call_operand.hbm [shape: f32[8,16,16], index: 1, kind: output, shape index: {}]
  %s2 = sld [smem:[#allocation0]]
  $region41: #{tpu_custom_call.1} parent=0
    _
  %s4 = ssub.s32 1, %s2
  %s5 = scalar_select 0, %s4, %s2
  $region1: #{tpu_custom_call.1} parent=0
    #allocation2 [shape = 'u8[4096]{0}', space=vmem, size = 0x1000, scoped, tag = 'input window, operand 0']
    #allocation3 [shape = 's32[2]{0}', space=sflag, size = 0x8, scoped, tag = 'scoped memory for tpu_custom_call.1']
    #allocation4 [shape = 's32[2]{0}', space=sflag, size = 0x8, scoped, tag = 'scoped memory for tpu_custom_call.1']
    #allocation5 [shape = 'u8[65536]{0}', space=vmem, size = 0x10000, scoped, tag = 'output window, operand 0']
    %6 = vsyncpa [#allocation3], 0
    %s7 = scalar_lea.sflag [#allocation3], 1
    %8 = vsyncpa %s7, 0
    %9 = vsyncpa [#allocation4], 0
    %s10 = scalar_lea.sflag [#allocation4], 1
    %11 = vsyncpa %s10, 0
    loop: start=0, step=1, limit=4
    $region2: #{tpu_custom_call.1} parent=1 // loop_pre_header
      _
    $region3: #{tpu_custom_call.1} parent=1 // loop_header
      %s13 = sphi 0, %s17
      %p14 = scmp.ge.s32.totalorder %s13, 4
      %s23 = sphi 0, %s25
      %s26 = sphi 0, %s23
      %s27 = sphi 0, %s26
      %s43 = sphi 0, %s27
      %s49 = sphi 0, %s51
      %s52 = sphi 0, %s49
      %s53 = sphi 0, %s52
      %s69 = sphi 0, %s53
    $region4: #{tpu_custom_call.1} parent=1 // loop_header_branch
      %16 = sbr.rel (%p14) target = $region8
    $region5: #{tpu_custom_call.1} parent=1 // loop_body
      %s18 = ssub.s32 %s13, 1
      %s19 = ssub.s32 %s13, 2
      %s20 = sadd.s32 %s13, 1
      %s21 = ssub.s32 %s13, %s20
      %p22 = scmp.eq.s32.totalorder %s21, 0
      %s24 = sadd.s32 %s23, 1
      %s25 = scalar_select %p22, %s23, %s24
      %p28 = pneg %p22
      %p29 = scmp.eq.s32.totalorder %s13, 1
      %p30 = por %p28, %p29
      %p31 = scmp.ne.s32.totalorder %s23, %s26
      %p32 = scmp.eq.s32.totalorder %s13, 0
      %p33 = por %p31, %p32
      %p34 = scmp.ne.s32.totalorder %s23, %s26
      %p35 = scmp.eq.s32.totalorder %s18, 1
      %p36 = por %p34, %p35
      %p37 = scmp.ne.s32.totalorder %s26, %s27
      %p38 = scmp.eq.s32.totalorder %s18, 0
      %p39 = por %p37, %p38
      %p40 = scmp.ne.s32.totalorder %s26, %s27
      %p41 = scmp.eq.s32.totalorder %s19, 1
      %p42 = por %p40, %p41
      %p44 = scmp.ne.s32.totalorder %s27, %s43
      %p45 = scmp.eq.s32.totalorder %s19, 0
      %p46 = por %p44, %p45
      %s47 = ssub.s32 %s13, %s20
      %p48 = scmp.eq.s32.totalorder %s47, 0
      %s50 = sadd.s32 %s49, 1
      %s51 = scalar_select %p48, %s49, %s50
      %p54 = pneg %p48
      %p55 = scmp.eq.s32.totalorder %s13, 1
      %p56 = por %p54, %p55
      %p57 = scmp.ne.s32.totalorder %s49, %s52
      %p58 = scmp.eq.s32.totalorder %s13, 0
      %p59 = por %p57, %p58
      %p60 = scmp.ne.s32.totalorder %s49, %s52
      %p61 = scmp.eq.s32.totalorder %s18, 1
      %p62 = por %p60, %p61
      %p63 = scmp.ne.s32.totalorder %s52, %s53
      %p64 = scmp.eq.s32.totalorder %s18, 0
      %p65 = por %p63, %p64
      %p66 = scmp.ne.s32.totalorder %s52, %s53
      %p67 = scmp.eq.s32.totalorder %s19, 1
      %p68 = por %p66, %p67
      %p70 = scmp.ne.s32.totalorder %s53, %s69
      %p71 = scmp.eq.s32.totalorder %s19, 0
      %p72 = por %p70, %p71
      %p73 = scmp.le.s32.totalorder 1, %s13
      %p74 = scmp.lt.s32.totalorder %s13, 3
      %p75 = pnand %p73, %p74
      %p76 = pneg %p75
      // Predicated region
      $region9: #{tpu_custom_call.1} parent=5 // pred_check
        _
      $region10: #{tpu_custom_call.1} parent=5 // pred_check_branch
        %78 = sbr.rel (%p75) target = $region12
      $region11: #{tpu_custom_call.1} parent=5 // pred_region
        %s79 = ssub.s32 %s13, 1
      $region12: #{tpu_custom_call.1} parent=5 // pred_fallthru
        _
      %p80 = scmp.lt.s32.totalorder %s13, 2
      // Predicated region
      $region13: #{tpu_custom_call.1} parent=5 // pred_check
        %p81 = pneg %p80
      $region14: #{tpu_custom_call.1} parent=5 // pred_check_branch
        %83 = sbr.rel (%p81) target = $region16
      $region15: #{tpu_custom_call.1} parent=5 // pred_region
        // Predicated region
        $region17: #{tpu_custom_call.1} parent=15 // pred_check
          %p84 = pneg %p33
        $region18: #{tpu_custom_call.1} parent=15 // pred_check_branch
          %86 = sbr.rel (%p84) target = $region20
        $region19: #{tpu_custom_call.1} parent=15 // pred_region
          %s87 = sand.u32 %s23, 1
          %s88 = scalar_lea.sflag [#allocation3], %s87
          %s89 = sand.u32 %s23, 1
          %s90 = smul.addr %s89, 4
          %s91 = scalar_lea.vmem [#allocation2], %s90
          %s93 = ssub.s32 64, 64
          %94 = vsyncadd %s88, %s93
          %s95 = smul.addr %s13, 64
          %s96 = scalar_lea.hbm %s0, %s95
          %s98 = sshll.u32 %s91, 4
          %s99 = int_to_ptr.vmem [resolvable:$true] %s98
          %101 = dma.hbm_to_vmem [thread:$0]  %s96, 64, %s99, %s88
        $region20: #{tpu_custom_call.1} parent=15 // pred_fallthru
          _
      $region16: #{tpu_custom_call.1} parent=5 // pred_fallthru
        _
      %p102 = scmp.le.s32.totalorder 1, %s13
      %p103 = scmp.lt.s32.totalorder %s13, 3
      %p104 = pnand %p102, %p103
      %p105 = pneg %p104
      // Predicated region
      $region21: #{tpu_custom_call.1} parent=5 // pred_check
        _
      $region22: #{tpu_custom_call.1} parent=5 // pred_check_branch
        %107 = sbr.rel (%p104) target = $region24
      $region23: #{tpu_custom_call.1} parent=5 // pred_region
        %s108 = ssub.s32 %s13, 1
        %s109 = sand.u32 %s26, 1
        %s110 = scalar_lea.sflag [#allocation3], %s109
        %s111 = sand.u32 %s26, 1
        %s112 = smul.addr %s111, 4
        %s113 = scalar_lea.vmem [#allocation2], %s112
        // Predicated region
        $region25: #{tpu_custom_call.1} parent=23 // pred_check
          %p114 = pneg %p39
        $region26: #{tpu_custom_call.1} parent=23 // pred_check_branch
          %116 = sbr.rel (%p114) target = $region28
        $region27: #{tpu_custom_call.1} parent=23 // pred_region
          %117 = dma.done %s110, 64
        $region28: #{tpu_custom_call.1} parent=23 // pred_fallthru
          _
        %s118 = sand.u32 %s26, 1
        %s119 = scalar_lea.sflag [#allocation3], %s118
        %s120 = sand.u32 %s26, 1
        %s121 = smul.addr %s120, 4
        %s122 = scalar_lea.vmem [#allocation2], %s121
        %p123 = pneg %p39
        %p124 = pneg %p36
        %p125 = pneg %p65
        %p126 = pneg %p62
        %s127 = sand.u32 %s52, 1
        %s128 = scalar_lea.sflag [#allocation4], %s127
        %s129 = sand.u32 %s52, 1
        %s130 = smul.addr %s129, 64
        %s131 = scalar_lea.vmem [#allocation5], %s130
        %s132 = smul.u32 4, %s18
        %v133 = vlaneseq
        %v134 = vshrl.u32 %v133, 7
        %v135 = vadd.s32 %v134, 8
        %v136 = vlaneseq
        %v137 = vand.u32 %v136, 127
        %v138 = vsub.s32 %v134, %v137
        %v139 = vsub.s32 %v135, %v137
        %vm140 = vcmp.lt.s32.totalorder %v138, 0
        %vm141 = vcmp.lt.s32.totalorder %v139, 0
        %v142 = vsel %vm140, 16, 0
        %v143 = vsel %vm141, 16, 0
        %v144 = vsub.s32 0, %v138
        %v145 = vsel %vm140, %v144, %v138
        %v146 = vsub.s32 0, %v139
        %v147 = vsel %vm141, %v146, %v139
        %vm148 = vcmp.lt.s32.totalorder %v145, 8
        %vm149 = vcmp.lt.s32.totalorder %v147, 8
        %vm150 = vcmp.gt.s32.totalorder %v145, 1
        %v151 = vsel %vm150, %v145, 1
        %vm152 = vcmp.gt.s32.totalorder %v147, 1
        %v153 = vsel %vm152, %v147, 1
        %v154 = vcvt.s32.f32 %v151
        %v155 = vcvt.s32.f32 %v153
        %v156 = vrcp.pop 8.0
        %v157 = vmul.f32 %v154, %v156
        %v158 = vmul.f32 %v155, %v156
        %v159 = vlog2.pop %v157
        %v160 = vmul.f32 %v159, 0.6931472
        %v161 = vlog2.pop %v158
        %v162 = vmul.f32 %v161, 0.6931472
        %v163 = vrcp.pop 2.7725887
        %v164 = vmul.f32 %v160, %v163
        %v165 = vmul.f32 %v162, %v163
        %v166 = vmul.f32 %v164, 8.0
        %v167 = vmul.f32 %v165, 8.0
        %v168 = vcvt.f32.s32.to.zero.pseudo %v166
        %v169 = vcvt.f32.s32.to.zero.pseudo %v167
        %v170 = vadd.s32 %v168, 8
        %v171 = vadd.s32 %v169, 8
        %vm172 = vcmp.lt.s32.totalorder %v170, 15
        %v173 = vsel %vm172, %v170, 15
        %vm174 = vcmp.lt.s32.totalorder %v171, 15
        %v175 = vsel %vm174, %v171, 15
        %v176 = vsel %vm148, %v145, %v173
        %v177 = vsel %vm149, %v147, %v175
        %v178 = vadd.s32 %v142, %v176
        %v179 = vadd.s32 %v143, %v177
        %v180 = vld [vmem:[%s113] sm:$0x1]
        %s182 = vtos %v180
        %v183 = vstv %s182
        %v185 = vld [vmem:[%s113 + $0x1] sm:$0x1]
        %s187 = vtos %v185
        %v188 = vstv %s187
        %vm190 = vcmp.eq.s32.totalorder %v178, 1
        %vm191 = vcmp.eq.s32.totalorder %v179, 1
        %192 = vrot.lane.b32.xlu0 %v180, 127
        %v193 = vpop.permute.xlu0 %192
        %s194 = vtos %v193
        %v195 = vstv %s194
        %v197 = vsel %vm190, %v195, %v183
        %v198 = vsel %vm191, %v195, %v183
        %199 = vrot.lane.b32.xlu0 %v185, 127
        %v200 = vpop.permute.xlu0 %199
        %s201 = vtos %v200
        %v202 = vstv %s201
        %v204 = vsel %vm190, %v202, %v188
        %v205 = vsel %vm191, %v202, %v188
        %vm206 = vcmp.eq.s32.totalorder %v178, 2
        %vm207 = vcmp.eq.s32.totalorder %v179, 2
        %208 = vrot.lane.b32.xlu0 %v180, 126
        %v209 = vpop.permute.xlu0 %208
        %s210 = vtos %v209
        %v211 = vstv %s210
        %v213 = vsel %vm206, %v211, %v197
        %v214 = vsel %vm207, %v211, %v198
        %215 = vrot.lane.b32.xlu0 %v185, 126
        %v216 = vpop.permute.xlu0 %215
        %s217 = vtos %v216
        %v218 = vstv %s217
        %v220 = vsel %vm206, %v218, %v204
        %v221 = vsel %vm207, %v218, %v205
        %vm222 = vcmp.eq.s32.totalorder %v178, 3
        %vm223 = vcmp.eq.s32.totalorder %v179, 3
        %224 = vrot.lane.b32.xlu0 %v180, 125
        %v225 = vpop.permute.xlu0 %224
        %s226 = vtos %v225
        %v227 = vstv %s226
        %v229 = vsel %vm222, %v227, %v213
        %v230 = vsel %vm223, %v227, %v214
        %231 = vrot.lane.b32.xlu0 %v185, 125
        %v232 = vpop.permute.xlu0 %231
        %s233 = vtos %v232
        %v234 = vstv %s233
        %v236 = vsel %vm222, %v234, %v220
        %v237 = vsel %vm223, %v234, %v221
        %vm238 = vcmp.eq.s32.totalorder %v178, 4
        %vm239 = vcmp.eq.s32.totalorder %v179, 4
        %240 = vrot.lane.b32.xlu0 %v180, 124
        %v241 = vpop.permute.xlu0 %240
        %s242 = vtos %v241
        %v243 = vstv %s242
        %v245 = vsel %vm238, %v243, %v229
        %v246 = vsel %vm239, %v243, %v230
        %247 = vrot.lane.b32.xlu0 %v185, 124
        %v248 = vpop.permute.xlu0 %247
        %s249 = vtos %v248
        %v250 = vstv %s249
        %v252 = vsel %vm238, %v250, %v236
        %v253 = vsel %vm239, %v250, %v237
        %vm254 = vcmp.eq.s32.totalorder %v178, 5
        %vm255 = vcmp.eq.s32.totalorder %v179, 5
        %256 = vrot.lane.b32.xlu0 %v180, 123
        %v257 = vpop.permute.xlu0 %256
        %s258 = vtos %v257
        %v259 = vstv %s258
        %v261 = vsel %vm254, %v259, %v245
        %v262 = vsel %vm255, %v259, %v246
        %263 = vrot.lane.b32.xlu0 %v185, 123
        %v264 = vpop.permute.xlu0 %263
        %s265 = vtos %v264
        %v266 = vstv %s265
        %v268 = vsel %vm254, %v266, %v252
        %v269 = vsel %vm255, %v266, %v253
        %vm270 = vcmp.eq.s32.totalorder %v178, 6
        %vm271 = vcmp.eq.s32.totalorder %v179, 6
        %272 = vrot.lane.b32.xlu0 %v180, 122
        %v273 = vpop.permute.xlu0 %272
        %s274 = vtos %v273
        %v275 = vstv %s274
        %v277 = vsel %vm270, %v275, %v261
        %v278 = vsel %vm271, %v275, %v262
        %279 = vrot.lane.b32.xlu0 %v185, 122
        %v280 = vpop.permute.xlu0 %279
        %s281 = vtos %v280
        %v282 = vstv %s281
        %v284 = vsel %vm270, %v282, %v268
        %v285 = vsel %vm271, %v282, %v269
        %vm286 = vcmp.eq.s32.totalorder %v178, 7
        %vm287 = vcmp.eq.s32.totalorder %v179, 7
        %288 = vrot.lane.b32.xlu0 %v180, 121
        %v289 = vpop.permute.xlu0 %288
        %s290 = vtos %v289
        %v291 = vstv %s290
        %v293 = vsel %vm286, %v291, %v277
        %v294 = vsel %vm287, %v291, %v278
        %295 = vrot.lane.b32.xlu0 %v185, 121
        %v296 = vpop.permute.xlu0 %295
        %s297 = vtos %v296
        %v298 = vstv %s297
        %v300 = vsel %vm286, %v298, %v284
        %v301 = vsel %vm287, %v298, %v285
        %vm302 = vcmp.eq.s32.totalorder %v178, 8
        %vm303 = vcmp.eq.s32.totalorder %v179, 8
        %304 = vrot.lane.b32.xlu0 %v180, 120
        %v305 = vpop.permute.xlu0 %304
        %s306 = vtos %v305
        %v307 = vstv %s306
        %v309 = vsel %vm302, %v307, %v293
        %v310 = vsel %vm303, %v307, %v294
        %311 = vrot.lane.b32.xlu0 %v185, 120
        %v312 = vpop.permute.xlu0 %311
        %s313 = vtos %v312
        %v314 = vstv %s313
        %v316 = vsel %vm302, %v314, %v300
        %v317 = vsel %vm303, %v314, %v301
        %vm318 = vcmp.eq.s32.totalorder %v178, 9
        %vm319 = vcmp.eq.s32.totalorder %v179, 9
        %320 = vrot.lane.b32.xlu0 %v180, 119
        %v321 = vpop.permute.xlu0 %320
        %s322 = vtos %v321
        %v323 = vstv %s322
        %v325 = vsel %vm318, %v323, %v309
        %v326 = vsel %vm319, %v323, %v310
        %327 = vrot.lane.b32.xlu0 %v185, 119
        %v328 = vpop.permute.xlu0 %327
        %s329 = vtos %v328
        %v330 = vstv %s329
        %v332 = vsel %vm318, %v330, %v316
        %v333 = vsel %vm319, %v330, %v317
        %vm334 = vcmp.eq.s32.totalorder %v178, 10
        %vm335 = vcmp.eq.s32.totalorder %v179, 10
        %336 = vrot.lane.b32.xlu0 %v180, 118
        %v337 = vpop.permute.xlu0 %336
        %s338 = vtos %v337
        %v339 = vstv %s338
        %v341 = vsel %vm334, %v339, %v325
        %v342 = vsel %vm335, %v339, %v326
        %343 = vrot.lane.b32.xlu0 %v185, 118
        %v344 = vpop.permute.xlu0 %343
        %s345 = vtos %v344
        %v346 = vstv %s345
        %v348 = vsel %vm334, %v346, %v332
        %v349 = vsel %vm335, %v346, %v333
        %vm350 = vcmp.eq.s32.totalorder %v178, 11
        %vm351 = vcmp.eq.s32.totalorder %v179, 11
        %352 = vrot.lane.b32.xlu0 %v180, 117
        %v353 = vpop.permute.xlu0 %352
        %s354 = vtos %v353
        %v355 = vstv %s354
        %v357 = vsel %vm350, %v355, %v341
        %v358 = vsel %vm351, %v355, %v342
        %359 = vrot.lane.b32.xlu0 %v185, 117
        %v360 = vpop.permute.xlu0 %359
        %s361 = vtos %v360
        %v362 = vstv %s361
        %v364 = vsel %vm350, %v362, %v348
        %v365 = vsel %vm351, %v362, %v349
        %vm366 = vcmp.eq.s32.totalorder %v178, 12
        %vm367 = vcmp.eq.s32.totalorder %v179, 12
        %368 = vrot.lane.b32.xlu0 %v180, 116
        %v369 = vpop.permute.xlu0 %368
        %s370 = vtos %v369
        %v371 = vstv %s370
        %v373 = vsel %vm366, %v371, %v357
        %v374 = vsel %vm367, %v371, %v358
        %375 = vrot.lane.b32.xlu0 %v185, 116
        %v376 = vpop.permute.xlu0 %375
        %s377 = vtos %v376
        %v378 = vstv %s377
        %v380 = vsel %vm366, %v378, %v364
        %v381 = vsel %vm367, %v378, %v365
        %vm382 = vcmp.eq.s32.totalorder %v178, 13
        %vm383 = vcmp.eq.s32.totalorder %v179, 13
        %384 = vrot.lane.b32.xlu0 %v180, 115
        %v385 = vpop.permute.xlu0 %384
        %s386 = vtos %v385
        %v387 = vstv %s386
        %v389 = vsel %vm382, %v387, %v373
        %v390 = vsel %vm383, %v387, %v374
        %391 = vrot.lane.b32.xlu0 %v185, 115
        %v392 = vpop.permute.xlu0 %391
        %s393 = vtos %v392
        %v394 = vstv %s393
        %v396 = vsel %vm382, %v394, %v380
        %v397 = vsel %vm383, %v394, %v381
        %vm398 = vcmp.eq.s32.totalorder %v178, 14
        %vm399 = vcmp.eq.s32.totalorder %v179, 14
        %400 = vrot.lane.b32.xlu0 %v180, 114
        %v401 = vpop.permute.xlu0 %400
        %s402 = vtos %v401
        %v403 = vstv %s402
        %v405 = vsel %vm398, %v403, %v389
        %v406 = vsel %vm399, %v403, %v390
        %407 = vrot.lane.b32.xlu0 %v185, 114
        %v408 = vpop.permute.xlu0 %407
        %s409 = vtos %v408
        %v410 = vstv %s409
        %v412 = vsel %vm398, %v410, %v396
        %v413 = vsel %vm399, %v410, %v397
        %vm414 = vcmp.eq.s32.totalorder %v178, 15
        %vm415 = vcmp.eq.s32.totalorder %v179, 15
        %416 = vrot.lane.b32.xlu0 %v180, 113
        %v417 = vpop.permute.xlu0 %416
        %s418 = vtos %v417
        %v419 = vstv %s418
        %v421 = vsel %vm414, %v419, %v405
        %v422 = vsel %vm415, %v419, %v406
        %423 = vrot.lane.b32.xlu0 %v185, 113
        %v424 = vpop.permute.xlu0 %423
        %s425 = vtos %v424
        %v426 = vstv %s425
        %v428 = vsel %vm414, %v426, %v412
        %v429 = vsel %vm415, %v426, %v413
        %vm430 = vcmp.eq.s32.totalorder %v178, 16
        %vm431 = vcmp.eq.s32.totalorder %v179, 16
        %432 = vrot.lane.b32.xlu0 %v180, 112
        %v433 = vpop.permute.xlu0 %432
        %s434 = vtos %v433
        %v435 = vstv %s434
        %v437 = vsel %vm430, %v435, %v421
        %v438 = vsel %vm431, %v435, %v422
        %439 = vrot.lane.b32.xlu0 %v185, 112
        %v440 = vpop.permute.xlu0 %439
        %s441 = vtos %v440
        %v442 = vstv %s441
        %v444 = vsel %vm430, %v442, %v428
        %v445 = vsel %vm431, %v442, %v429
        %vm446 = vcmp.eq.s32.totalorder %v178, 17
        %vm447 = vcmp.eq.s32.totalorder %v179, 17
        %448 = vrot.lane.b32.xlu0 %v180, 111
        %v449 = vpop.permute.xlu0 %448
        %s450 = vtos %v449
        %v451 = vstv %s450
        %v453 = vsel %vm446, %v451, %v437
        %v454 = vsel %vm447, %v451, %v438
        %455 = vrot.lane.b32.xlu0 %v185, 111
        %v456 = vpop.permute.xlu0 %455
        %s457 = vtos %v456
        %v458 = vstv %s457
        %v460 = vsel %vm446, %v458, %v444
        %v461 = vsel %vm447, %v458, %v445
        %vm462 = vcmp.eq.s32.totalorder %v178, 18
        %vm463 = vcmp.eq.s32.totalorder %v179, 18
        %464 = vrot.lane.b32.xlu0 %v180, 110
        %v465 = vpop.permute.xlu0 %464
        %s466 = vtos %v465
        %v467 = vstv %s466
        %v469 = vsel %vm462, %v467, %v453
        %v470 = vsel %vm463, %v467, %v454
        %471 = vrot.lane.b32.xlu0 %v185, 110
        %v472 = vpop.permute.xlu0 %471
        %s473 = vtos %v472
        %v474 = vstv %s473
        %v476 = vsel %vm462, %v474, %v460
        %v477 = vsel %vm463, %v474, %v461
        %vm478 = vcmp.eq.s32.totalorder %v178, 19
        %vm479 = vcmp.eq.s32.totalorder %v179, 19
        %480 = vrot.lane.b32.xlu0 %v180, 109
        %v481 = vpop.permute.xlu0 %480
        %s482 = vtos %v481
        %v483 = vstv %s482
        %v485 = vsel %vm478, %v483, %v469
        %v486 = vsel %vm479, %v483, %v470
        %487 = vrot.lane.b32.xlu0 %v185, 109
        %v488 = vpop.permute.xlu0 %487
        %s489 = vtos %v488
        %v490 = vstv %s489
        %v492 = vsel %vm478, %v490, %v476
        %v493 = vsel %vm479, %v490, %v477
        %vm494 = vcmp.eq.s32.totalorder %v178, 20
        %vm495 = vcmp.eq.s32.totalorder %v179, 20
        %496 = vrot.lane.b32.xlu0 %v180, 108
        %v497 = vpop.permute.xlu0 %496
        %s498 = vtos %v497
        %v499 = vstv %s498
        %v501 = vsel %vm494, %v499, %v485
        %v502 = vsel %vm495, %v499, %v486
        %503 = vrot.lane.b32.xlu0 %v185, 108
        %v504 = vpop.permute.xlu0 %503
        %s505 = vtos %v504
        %v506 = vstv %s505
        %v508 = vsel %vm494, %v506, %v492
        %v509 = vsel %vm495, %v506, %v493
        %vm510 = vcmp.eq.s32.totalorder %v178, 21
        %vm511 = vcmp.eq.s32.totalorder %v179, 21
        %512 = vrot.lane.b32.xlu0 %v180, 107
        %v513 = vpop.permute.xlu0 %512
        %s514 = vtos %v513
        %v515 = vstv %s514
        %v517 = vsel %vm510, %v515, %v501
        %v518 = vsel %vm511, %v515, %v502
        %519 = vrot.lane.b32.xlu0 %v185, 107
        %v520 = vpop.permute.xlu0 %519
        %s521 = vtos %v520
        %v522 = vstv %s521
        %v524 = vsel %vm510, %v522, %v508
        %v525 = vsel %vm511, %v522, %v509
        %vm526 = vcmp.eq.s32.totalorder %v178, 22
        %vm527 = vcmp.eq.s32.totalorder %v179, 22
        %528 = vrot.lane.b32.xlu0 %v180, 106
        %v529 = vpop.permute.xlu0 %528
        %s530 = vtos %v529
        %v531 = vstv %s530
        %v533 = vsel %vm526, %v531, %v517
        %v534 = vsel %vm527, %v531, %v518
        %535 = vrot.lane.b32.xlu0 %v185, 106
        %v536 = vpop.permute.xlu0 %535
        %s537 = vtos %v536
        %v538 = vstv %s537
        %v540 = vsel %vm526, %v538, %v524
        %v541 = vsel %vm527, %v538, %v525
        %vm542 = vcmp.eq.s32.totalorder %v178, 23
        %vm543 = vcmp.eq.s32.totalorder %v179, 23
        %544 = vrot.lane.b32.xlu0 %v180, 105
        %v545 = vpop.permute.xlu0 %544
        %s546 = vtos %v545
        %v547 = vstv %s546
        %v549 = vsel %vm542, %v547, %v533
        %v550 = vsel %vm543, %v547, %v534
        %551 = vrot.lane.b32.xlu0 %v185, 105
        %v552 = vpop.permute.xlu0 %551
        %s553 = vtos %v552
        %v554 = vstv %s553
        %v556 = vsel %vm542, %v554, %v540
        %v557 = vsel %vm543, %v554, %v541
        %vm558 = vcmp.eq.s32.totalorder %v178, 24
        %vm559 = vcmp.eq.s32.totalorder %v179, 24
        %560 = vrot.lane.b32.xlu0 %v180, 104
        %v561 = vpop.permute.xlu0 %560
        %s562 = vtos %v561
        %v563 = vstv %s562
        %v565 = vsel %vm558, %v563, %v549
        %v566 = vsel %vm559, %v563, %v550
        %567 = vrot.lane.b32.xlu0 %v185, 104
        %v568 = vpop.permute.xlu0 %567
        %s569 = vtos %v568
        %v570 = vstv %s569
        %v572 = vsel %vm558, %v570, %v556
        %v573 = vsel %vm559, %v570, %v557
        %vm574 = vcmp.eq.s32.totalorder %v178, 25
        %vm575 = vcmp.eq.s32.totalorder %v179, 25
        %576 = vrot.lane.b32.xlu0 %v180, 103
        %v577 = vpop.permute.xlu0 %576
        %s578 = vtos %v577
        %v579 = vstv %s578
        %v581 = vsel %vm574, %v579, %v565
        %v582 = vsel %vm575, %v579, %v566
        %583 = vrot.lane.b32.xlu0 %v185, 103
        %v584 = vpop.permute.xlu0 %583
        %s585 = vtos %v584
        %v586 = vstv %s585
        %v588 = vsel %vm574, %v586, %v572
        %v589 = vsel %vm575, %v586, %v573
        %vm590 = vcmp.eq.s32.totalorder %v178, 26
        %vm591 = vcmp.eq.s32.totalorder %v179, 26
        %592 = vrot.lane.b32.xlu0 %v180, 102
        %v593 = vpop.permute.xlu0 %592
        %s594 = vtos %v593
        %v595 = vstv %s594
        %v597 = vsel %vm590, %v595, %v581
        %v598 = vsel %vm591, %v595, %v582
        %599 = vrot.lane.b32.xlu0 %v185, 102
        %v600 = vpop.permute.xlu0 %599
        %s601 = vtos %v600
        %v602 = vstv %s601
        %v604 = vsel %vm590, %v602, %v588
        %v605 = vsel %vm591, %v602, %v589
        %vm606 = vcmp.eq.s32.totalorder %v178, 27
        %vm607 = vcmp.eq.s32.totalorder %v179, 27
        %608 = vrot.lane.b32.xlu0 %v180, 101
        %v609 = vpop.permute.xlu0 %608
        %s610 = vtos %v609
        %v611 = vstv %s610
        %v613 = vsel %vm606, %v611, %v597
        %v614 = vsel %vm607, %v611, %v598
        %615 = vrot.lane.b32.xlu0 %v185, 101
        %v616 = vpop.permute.xlu0 %615
        %s617 = vtos %v616
        %v618 = vstv %s617
        %v620 = vsel %vm606, %v618, %v604
        %v621 = vsel %vm607, %v618, %v605
        %vm622 = vcmp.eq.s32.totalorder %v178, 28
        %vm623 = vcmp.eq.s32.totalorder %v179, 28
        %624 = vrot.lane.b32.xlu0 %v180, 100
        %v625 = vpop.permute.xlu0 %624
        %s626 = vtos %v625
        %v627 = vstv %s626
        %v629 = vsel %vm622, %v627, %v613
        %v630 = vsel %vm623, %v627, %v614
        %631 = vrot.lane.b32.xlu0 %v185, 100
        %v632 = vpop.permute.xlu0 %631
        %s633 = vtos %v632
        %v634 = vstv %s633
        %v636 = vsel %vm622, %v634, %v620
        %v637 = vsel %vm623, %v634, %v621
        %vm638 = vcmp.eq.s32.totalorder %v178, 29
        %vm639 = vcmp.eq.s32.totalorder %v179, 29
        %640 = vrot.lane.b32.xlu0 %v180, 99
        %v641 = vpop.permute.xlu0 %640
        %s642 = vtos %v641
        %v643 = vstv %s642
        %v645 = vsel %vm638, %v643, %v629
        %v646 = vsel %vm639, %v643, %v630
        %647 = vrot.lane.b32.xlu0 %v185, 99
        %v648 = vpop.permute.xlu0 %647
        %s649 = vtos %v648
        %v650 = vstv %s649
        %v652 = vsel %vm638, %v650, %v636
        %v653 = vsel %vm639, %v650, %v637
        %vm654 = vcmp.eq.s32.totalorder %v178, 30
        %vm655 = vcmp.eq.s32.totalorder %v179, 30
        %656 = vrot.lane.b32.xlu0 %v180, 98
        %v657 = vpop.permute.xlu0 %656
        %s658 = vtos %v657
        %v659 = vstv %s658
        %v661 = vsel %vm654, %v659, %v645
        %v662 = vsel %vm655, %v659, %v646
        %663 = vrot.lane.b32.xlu0 %v185, 98
        %v664 = vpop.permute.xlu0 %663
        %s665 = vtos %v664
        %v666 = vstv %s665
        %v668 = vsel %vm654, %v666, %v652
        %v669 = vsel %vm655, %v666, %v653
        %vm670 = vcmp.eq.s32.totalorder %v178, 31
        %vm671 = vcmp.eq.s32.totalorder %v179, 31
        %672 = vrot.lane.b32.xlu0 %v180, 97
        %v673 = vpop.permute.xlu0 %672
        %s674 = vtos %v673
        %v675 = vstv %s674
        %v677 = vsel %vm670, %v675, %v661
        %v678 = vsel %vm671, %v675, %v662
        %679 = vrot.lane.b32.xlu0 %v185, 97
        %v680 = vpop.permute.xlu0 %679
        %s681 = vtos %v680
        %v682 = vstv %s681
        %v684 = vsel %vm670, %v682, %v668
        %v685 = vsel %vm671, %v682, %v669
        %vm686 = vcmask 130048
        %687 = vst.msk [vmem:[%s131] sm:$0xff] %vm686, %v677
        %688 = vst.msk [vmem:[%s131 + $0x8] sm:$0xff] %vm686, %v678
        %s689 = scalar_lea.vmem %s131, 16 [#allocation5]
        %690 = vst.msk [vmem:[%s689] sm:$0xff] %vm686, %v684
        %691 = vst.msk [vmem:[%s689 + $0x8] sm:$0xff] %vm686, %v685
        %v692 = vld [vmem:[%s113 + $0x2] sm:$0x1]
        %s694 = vtos %v692
        %v695 = vstv %s694
        %v697 = vld [vmem:[%s113 + $0x3] sm:$0x1]
        %s699 = vtos %v697
        %v700 = vstv %s699
        %702 = vrot.lane.b32.xlu0 %v692, 127
        %v703 = vpop.permute.xlu0 %702
        %s704 = vtos %v703
        %v705 = vstv %s704
        %v707 = vsel %vm190, %v705, %v695
        %v708 = vsel %vm191, %v705, %v695
        %709 = vrot.lane.b32.xlu0 %v697, 127
        %v710 = vpop.permute.xlu0 %709
        %s711 = vtos %v710
        %v712 = vstv %s711
        %v714 = vsel %vm190, %v712, %v700
        %v715 = vsel %vm191, %v712, %v700
        %716 = vrot.lane.b32.xlu0 %v692, 126
        %v717 = vpop.permute.xlu0 %716
        %s718 = vtos %v717
        %v719 = vstv %s718
        %v721 = vsel %vm206, %v719, %v707
        %v722 = vsel %vm207, %v719, %v708
        %723 = vrot.lane.b32.xlu0 %v697, 126
        %v724 = vpop.permute.xlu0 %723
        %s725 = vtos %v724
        %v726 = vstv %s725
        %v728 = vsel %vm206, %v726, %v714
        %v729 = vsel %vm207, %v726, %v715
        %730 = vrot.lane.b32.xlu0 %v692, 125
        %v731 = vpop.permute.xlu0 %730
        %s732 = vtos %v731
        %v733 = vstv %s732
        %v735 = vsel %vm222, %v733, %v721
        %v736 = vsel %vm223, %v733, %v722
        %737 = vrot.lane.b32.xlu0 %v697, 125
        %v738 = vpop.permute.xlu0 %737
        %s739 = vtos %v738
        %v740 = vstv %s739
        %v742 = vsel %vm222, %v740, %v728
        %v743 = vsel %vm223, %v740, %v729
        %744 = vrot.lane.b32.xlu0 %v692, 124
        %v745 = vpop.permute.xlu0 %744
        %s746 = vtos %v745
        %v747 = vstv %s746
        %v749 = vsel %vm238, %v747, %v735
        %v750 = vsel %vm239, %v747, %v736
        %751 = vrot.lane.b32.xlu0 %v697, 124
        %v752 = vpop.permute.xlu0 %751
        %s753 = vtos %v752
        %v754 = vstv %s753
        %v756 = vsel %vm238, %v754, %v742
        %v757 = vsel %vm239, %v754, %v743
        %758 = vrot.lane.b32.xlu0 %v692, 123
        %v759 = vpop.permute.xlu0 %758
        %s760 = vtos %v759
        %v761 = vstv %s760
        %v763 = vsel %vm254, %v761, %v749
        %v764 = vsel %vm255, %v761, %v750
        %765 = vrot.lane.b32.xlu0 %v697, 123
        %v766 = vpop.permute.xlu0 %765
        %s767 = vtos %v766
        %v768 = vstv %s767
        %v770 = vsel %vm254, %v768, %v756
        %v771 = vsel %vm255, %v768, %v757
        %772 = vrot.lane.b32.xlu0 %v692, 122
        %v773 = vpop.permute.xlu0 %772
        %s774 = vtos %v773
        %v775 = vstv %s774
        %v777 = vsel %vm270, %v775, %v763
        %v778 = vsel %vm271, %v775, %v764
        %779 = vrot.lane.b32.xlu0 %v697, 122
        %v780 = vpop.permute.xlu0 %779
        %s781 = vtos %v780
        %v782 = vstv %s781
        %v784 = vsel %vm270, %v782, %v770
        %v785 = vsel %vm271, %v782, %v771
        %786 = vrot.lane.b32.xlu0 %v692, 121
        %v787 = vpop.permute.xlu0 %786
        %s788 = vtos %v787
        %v789 = vstv %s788
        %v791 = vsel %vm286, %v789, %v777
        %v792 = vsel %vm287, %v789, %v778
        %793 = vrot.lane.b32.xlu0 %v697, 121
        %v794 = vpop.permute.xlu0 %793
        %s795 = vtos %v794
        %v796 = vstv %s795
        %v798 = vsel %vm286, %v796, %v784
        %v799 = vsel %vm287, %v796, %v785
        %800 = vrot.lane.b32.xlu0 %v692, 120
        %v801 = vpop.permute.xlu0 %800
        %s802 = vtos %v801
        %v803 = vstv %s802
        %v805 = vsel %vm302, %v803, %v791
        %v806 = vsel %vm303, %v803, %v792
        %807 = vrot.lane.b32.xlu0 %v697, 120
        %v808 = vpop.permute.xlu0 %807
        %s809 = vtos %v808
        %v810 = vstv %s809
        %v812 = vsel %vm302, %v810, %v798
        %v813 = vsel %vm303, %v810, %v799
        %814 = vrot.lane.b32.xlu0 %v692, 119
        %v815 = vpop.permute.xlu0 %814
        %s816 = vtos %v815
        %v817 = vstv %s816
        %v819 = vsel %vm318, %v817, %v805
        %v820 = vsel %vm319, %v817, %v806
        %821 = vrot.lane.b32.xlu0 %v697, 119
        %v822 = vpop.permute.xlu0 %821
        %s823 = vtos %v822
        %v824 = vstv %s823
        %v826 = vsel %vm318, %v824, %v812
        %v827 = vsel %vm319, %v824, %v813
        %828 = vrot.lane.b32.xlu0 %v692, 118
        %v829 = vpop.permute.xlu0 %828
        %s830 = vtos %v829
        %v831 = vstv %s830
        %v833 = vsel %vm334, %v831, %v819
        %v834 = vsel %vm335, %v831, %v820
        %835 = vrot.lane.b32.xlu0 %v697, 118
        %v836 = vpop.permute.xlu0 %835
        %s837 = vtos %v836
        %v838 = vstv %s837
        %v840 = vsel %vm334, %v838, %v826
        %v841 = vsel %vm335, %v838, %v827
        %842 = vrot.lane.b32.xlu0 %v692, 117
        %v843 = vpop.permute.xlu0 %842
        %s844 = vtos %v843
        %v845 = vstv %s844
        %v847 = vsel %vm350, %v845, %v833
        %v848 = vsel %vm351, %v845, %v834
        %849 = vrot.lane.b32.xlu0 %v697, 117
        %v850 = vpop.permute.xlu0 %849
        %s851 = vtos %v850
        %v852 = vstv %s851
        %v854 = vsel %vm350, %v852, %v840
        %v855 = vsel %vm351, %v852, %v841
        %856 = vrot.lane.b32.xlu0 %v692, 116
        %v857 = vpop.permute.xlu0 %856
        %s858 = vtos %v857
        %v859 = vstv %s858
        %v861 = vsel %vm366, %v859, %v847
        %v862 = vsel %vm367, %v859, %v848
        %863 = vrot.lane.b32.xlu0 %v697, 116
        %v864 = vpop.permute.xlu0 %863
        %s865 = vtos %v864
        %v866 = vstv %s865
        %v868 = vsel %vm366, %v866, %v854
        %v869 = vsel %vm367, %v866, %v855
        %870 = vrot.lane.b32.xlu0 %v692, 115
        %v871 = vpop.permute.xlu0 %870
        %s872 = vtos %v871
        %v873 = vstv %s872
        %v875 = vsel %vm382, %v873, %v861
        %v876 = vsel %vm383, %v873, %v862
        %877 = vrot.lane.b32.xlu0 %v697, 115
        %v878 = vpop.permute.xlu0 %877
        %s879 = vtos %v878
        %v880 = vstv %s879
        %v882 = vsel %vm382, %v880, %v868
        %v883 = vsel %vm383, %v880, %v869
        %884 = vrot.lane.b32.xlu0 %v692, 114
        %v885 = vpop.permute.xlu0 %884
        %s886 = vtos %v885
        %v887 = vstv %s886
        %v889 = vsel %vm398, %v887, %v875
        %v890 = vsel %vm399, %v887, %v876
        %891 = vrot.lane.b32.xlu0 %v697, 114
        %v892 = vpop.permute.xlu0 %891
        %s893 = vtos %v892
        %v894 = vstv %s893
        %v896 = vsel %vm398, %v894, %v882
        %v897 = vsel %vm399, %v894, %v883
        %898 = vrot.lane.b32.xlu0 %v692, 113
        %v899 = vpop.permute.xlu0 %898
        %s900 = vtos %v899
        %v901 = vstv %s900
        %v903 = vsel %vm414, %v901, %v889
        %v904 = vsel %vm415, %v901, %v890
        %905 = vrot.lane.b32.xlu0 %v697, 113
        %v906 = vpop.permute.xlu0 %905
        %s907 = vtos %v906
        %v908 = vstv %s907
        %v910 = vsel %vm414, %v908, %v896
        %v911 = vsel %vm415, %v908, %v897
        %912 = vrot.lane.b32.xlu0 %v692, 112
        %v913 = vpop.permute.xlu0 %912
        %s914 = vtos %v913
        %v915 = vstv %s914
        %v917 = vsel %vm430, %v915, %v903
        %v918 = vsel %vm431, %v915, %v904
        %919 = vrot.lane.b32.xlu0 %v697, 112
        %v920 = vpop.permute.xlu0 %919
        %s921 = vtos %v920
        %v922 = vstv %s921
        %v924 = vsel %vm430, %v922, %v910
        %v925 = vsel %vm431, %v922, %v911
        %926 = vrot.lane.b32.xlu0 %v692, 111
        %v927 = vpop.permute.xlu0 %926
        %s928 = vtos %v927
        %v929 = vstv %s928
        %v931 = vsel %vm446, %v929, %v917
        %v932 = vsel %vm447, %v929, %v918
        %933 = vrot.lane.b32.xlu0 %v697, 111
        %v934 = vpop.permute.xlu0 %933
        %s935 = vtos %v934
        %v936 = vstv %s935
        %v938 = vsel %vm446, %v936, %v924
        %v939 = vsel %vm447, %v936, %v925
        %940 = vrot.lane.b32.xlu0 %v692, 110
        %v941 = vpop.permute.xlu0 %940
        %s942 = vtos %v941
        %v943 = vstv %s942
        %v945 = vsel %vm462, %v943, %v931
        %v946 = vsel %vm463, %v943, %v932
        %947 = vrot.lane.b32.xlu0 %v697, 110
        %v948 = vpop.permute.xlu0 %947
        %s949 = vtos %v948
        %v950 = vstv %s949
        %v952 = vsel %vm462, %v950, %v938
        %v953 = vsel %vm463, %v950, %v939
        %954 = vrot.lane.b32.xlu0 %v692, 109
        %v955 = vpop.permute.xlu0 %954
        %s956 = vtos %v955
        %v957 = vstv %s956
        %v959 = vsel %vm478, %v957, %v945
        %v960 = vsel %vm479, %v957, %v946
        %961 = vrot.lane.b32.xlu0 %v697, 109
        %v962 = vpop.permute.xlu0 %961
        %s963 = vtos %v962
        %v964 = vstv %s963
        %v966 = vsel %vm478, %v964, %v952
        %v967 = vsel %vm479, %v964, %v953
        %968 = vrot.lane.b32.xlu0 %v692, 108
        %v969 = vpop.permute.xlu0 %968
        %s970 = vtos %v969
        %v971 = vstv %s970
        %v973 = vsel %vm494, %v971, %v959
        %v974 = vsel %vm495, %v971, %v960
        %975 = vrot.lane.b32.xlu0 %v697, 108
        %v976 = vpop.permute.xlu0 %975
        %s977 = vtos %v976
        %v978 = vstv %s977
        %v980 = vsel %vm494, %v978, %v966
        %v981 = vsel %vm495, %v978, %v967
        %982 = vrot.lane.b32.xlu0 %v692, 107
        %v983 = vpop.permute.xlu0 %982
        %s984 = vtos %v983
        %v985 = vstv %s984
        %v987 = vsel %vm510, %v985, %v973
        %v988 = vsel %vm511, %v985, %v974
        %989 = vrot.lane.b32.xlu0 %v697, 107
        %v990 = vpop.permute.xlu0 %989
        %s991 = vtos %v990
        %v992 = vstv %s991
        %v994 = vsel %vm510, %v992, %v980
        %v995 = vsel %vm511, %v992, %v981
        %996 = vrot.lane.b32.xlu0 %v692, 106
        %v997 = vpop.permute.xlu0 %996
        %s998 = vtos %v997
        %v999 = vstv %s998
        %v1001 = vsel %vm526, %v999, %v987
        %v1002 = vsel %vm527, %v999, %v988
        %1003 = vrot.lane.b32.xlu0 %v697, 106
        %v1004 = vpop.permute.xlu0 %1003
        %s1005 = vtos %v1004
        %v1006 = vstv %s1005
        %v1008 = vsel %vm526, %v1006, %v994
        %v1009 = vsel %vm527, %v1006, %v995
        %1010 = vrot.lane.b32.xlu0 %v692, 105
        %v1011 = vpop.permute.xlu0 %1010
        %s1012 = vtos %v1011
        %v1013 = vstv %s1012
        %v1015 = vsel %vm542, %v1013, %v1001
        %v1016 = vsel %vm543, %v1013, %v1002
        %1017 = vrot.lane.b32.xlu0 %v697, 105
        %v1018 = vpop.permute.xlu0 %1017
        %s1019 = vtos %v1018
        %v1020 = vstv %s1019
        %v1022 = vsel %vm542, %v1020, %v1008
        %v1023 = vsel %vm543, %v1020, %v1009
        %1024 = vrot.lane.b32.xlu0 %v692, 104
        %v1025 = vpop.permute.xlu0 %1024
        %s1026 = vtos %v1025
        %v1027 = vstv %s1026
        %v1029 = vsel %vm558, %v1027, %v1015
        %v1030 = vsel %vm559, %v1027, %v1016
        %1031 = vrot.lane.b32.xlu0 %v697, 104
        %v1032 = vpop.permute.xlu0 %1031
        %s1033 = vtos %v1032
        %v1034 = vstv %s1033
        %v1036 = vsel %vm558, %v1034, %v1022
        %v1037 = vsel %vm559, %v1034, %v1023
        %1038 = vrot.lane.b32.xlu0 %v692, 103
        %v1039 = vpop.permute.xlu0 %1038
        %s1040 = vtos %v1039
        %v1041 = vstv %s1040
        %v1043 = vsel %vm574, %v1041, %v1029
        %v1044 = vsel %vm575, %v1041, %v1030
        %1045 = vrot.lane.b32.xlu0 %v697, 103
        %v1046 = vpop.permute.xlu0 %1045
        %s1047 = vtos %v1046
        %v1048 = vstv %s1047
        %v1050 = vsel %vm574, %v1048, %v1036
        %v1051 = vsel %vm575, %v1048, %v1037
        %1052 = vrot.lane.b32.xlu0 %v692, 102
        %v1053 = vpop.permute.xlu0 %1052
        %s1054 = vtos %v1053
        %v1055 = vstv %s1054
        %v1057 = vsel %vm590, %v1055, %v1043
        %v1058 = vsel %vm591, %v1055, %v1044
        %1059 = vrot.lane.b32.xlu0 %v697, 102
        %v1060 = vpop.permute.xlu0 %1059
        %s1061 = vtos %v1060
        %v1062 = vstv %s1061
        %v1064 = vsel %vm590, %v1062, %v1050
        %v1065 = vsel %vm591, %v1062, %v1051
        %1066 = vrot.lane.b32.xlu0 %v692, 101
        %v1067 = vpop.permute.xlu0 %1066
        %s1068 = vtos %v1067
        %v1069 = vstv %s1068
        %v1071 = vsel %vm606, %v1069, %v1057
        %v1072 = vsel %vm607, %v1069, %v1058
        %1073 = vrot.lane.b32.xlu0 %v697, 101
        %v1074 = vpop.permute.xlu0 %1073
        %s1075 = vtos %v1074
        %v1076 = vstv %s1075
        %v1078 = vsel %vm606, %v1076, %v1064
        %v1079 = vsel %vm607, %v1076, %v1065
        %1080 = vrot.lane.b32.xlu0 %v692, 100
        %v1081 = vpop.permute.xlu0 %1080
        %s1082 = vtos %v1081
        %v1083 = vstv %s1082
        %v1085 = vsel %vm622, %v1083, %v1071
        %v1086 = vsel %vm623, %v1083, %v1072
        %1087 = vrot.lane.b32.xlu0 %v697, 100
        %v1088 = vpop.permute.xlu0 %1087
        %s1089 = vtos %v1088
        %v1090 = vstv %s1089
        %v1092 = vsel %vm622, %v1090, %v1078
        %v1093 = vsel %vm623, %v1090, %v1079
        %1094 = vrot.lane.b32.xlu0 %v692, 99
        %v1095 = vpop.permute.xlu0 %1094
        %s1096 = vtos %v1095
        %v1097 = vstv %s1096
        %v1099 = vsel %vm638, %v1097, %v1085
        %v1100 = vsel %vm639, %v1097, %v1086
        %1101 = vrot.lane.b32.xlu0 %v697, 99
        %v1102 = vpop.permute.xlu0 %1101
        %s1103 = vtos %v1102
        %v1104 = vstv %s1103
        %v1106 = vsel %vm638, %v1104, %v1092
        %v1107 = vsel %vm639, %v1104, %v1093
        %1108 = vrot.lane.b32.xlu0 %v692, 98
        %v1109 = vpop.permute.xlu0 %1108
        %s1110 = vtos %v1109
        %v1111 = vstv %s1110
        %v1113 = vsel %vm654, %v1111, %v1099
        %v1114 = vsel %vm655, %v1111, %v1100
        %1115 = vrot.lane.b32.xlu0 %v697, 98
        %v1116 = vpop.permute.xlu0 %1115
        %s1117 = vtos %v1116
        %v1118 = vstv %s1117
        %v1120 = vsel %vm654, %v1118, %v1106
        %v1121 = vsel %vm655, %v1118, %v1107
        %1122 = vrot.lane.b32.xlu0 %v692, 97
        %v1123 = vpop.permute.xlu0 %1122
        %s1124 = vtos %v1123
        %v1125 = vstv %s1124
        %v1127 = vsel %vm670, %v1125, %v1113
        %v1128 = vsel %vm671, %v1125, %v1114
        %1129 = vrot.lane.b32.xlu0 %v697, 97
        %v1130 = vpop.permute.xlu0 %1129
        %s1131 = vtos %v1130
        %v1132 = vstv %s1131
        %v1134 = vsel %vm670, %v1132, %v1120
        %v1135 = vsel %vm671, %v1132, %v1121
        %s1136 = scalar_lea.vmem %s131, 32 [#allocation5]
        %1137 = vst.msk [vmem:[%s1136] sm:$0xff] %vm686, %v1127
        %1138 = vst.msk [vmem:[%s1136 + $0x8] sm:$0xff] %vm686, %v1128
        %s1139 = scalar_lea.vmem %s131, 48 [#allocation5]
        %1140 = vst.msk [vmem:[%s1139] sm:$0xff] %vm686, %v1134
        %1141 = vst.msk [vmem:[%s1139 + $0x8] sm:$0xff] %vm686, %v1135
        %s1142 = sand.u32 %s52, 1
        %s1143 = scalar_lea.sflag [#allocation4], %s1142
        %s1144 = sand.u32 %s52, 1
        %s1145 = smul.addr %s1144, 64
        %s1146 = scalar_lea.vmem [#allocation5], %s1145
        // Predicated region
        $region29: #{tpu_custom_call.1} parent=23 // pred_check
          %p1147 = pneg %p62
        $region30: #{tpu_custom_call.1} parent=23 // pred_check_branch
          %1149 = sbr.rel (%p1147) target = $region32
        $region31: #{tpu_custom_call.1} parent=23 // pred_region
          %s1150 = smul.u32 4, %s18
          %s1152 = ssub.s32 1024, 1024
          %1153 = vsyncadd %s1143, %s1152
          %s1154 = smul.addr %s1150, 2
          %s1155 = smul.addr %s1154, 128
          %s1156 = scalar_lea.hbm %s1, %s1155
          %s1157 = sshll.u32 %s1146, 4
          %s1158 = int_to_ptr.vmem [resolvable:$true] %s1157
          %1163 = dma.vmem_to_hbm [thread:$0]  %s1158, 1024, %s1156, %s1143, 128, 128, 8
        $region32: #{tpu_custom_call.1} parent=23 // pred_fallthru
          _
      $region24: #{tpu_custom_call.1} parent=5 // pred_fallthru
        _
      %p1164 = scmp.le.s32.totalorder 2, %s13
      // Predicated region
      $region33: #{tpu_custom_call.1} parent=5 // pred_check
        %p1165 = pneg %p1164
      $region34: #{tpu_custom_call.1} parent=5 // pred_check_branch
        %1167 = sbr.rel (%p1165) target = $region36
      $region35: #{tpu_custom_call.1} parent=5 // pred_region
        %s1168 = ssub.s32 %s13, 2
        // Predicated region
        $region37: #{tpu_custom_call.1} parent=35 // pred_check
          %p1169 = pneg %p68
        $region38: #{tpu_custom_call.1} parent=35 // pred_check_branch
          %1171 = sbr.rel (%p1169) target = $region40
        $region39: #{tpu_custom_call.1} parent=35 // pred_region
          %s1172 = sand.u32 %s53, 1
          %s1173 = scalar_lea.sflag [#allocation4], %s1172
          %s1174 = sand.u32 %s53, 1
          %s1175 = smul.addr %s1174, 64
          %s1176 = scalar_lea.vmem [#allocation5], %s1175
          %1177 = dma.done %s1173, 1024
        $region40: #{tpu_custom_call.1} parent=35 // pred_fallthru
          _
      $region36: #{tpu_custom_call.1} parent=5 // pred_fallthru
        _
    $region6: #{tpu_custom_call.1} parent=1 // loop_footer
      %s17 = sadd.s32 1, %s13
    $region7: #{tpu_custom_call.1} parent=1 // loop_footer_branch
      %12 = sbr.rel target = $region3
    $region8: #{tpu_custom_call.1} parent=1 // loop_exit
      _
    %1178 = vsyncpa [#allocation3], 1
    %s1179 = scalar_lea.sflag [#allocation3], 1
    %1180 = vsyncpa %s1179, 1
    %1181 = vsyncpa [#allocation4], 1
    %s1182 = scalar_lea.sflag [#allocation4], 1
    %1183 = vsyncpa %s1182, 1

</llo_original>
